<compile_context>
chip_gen: v5e
topology: v5e:2x2
jax: 0.10.0
libtpu: 0.0.40
codegen_flags: <defaults>
</compile_context>

<pallas_src>
import functools

import jax
import jax.numpy as jnp
from jax.experimental import pallas as pl
from jax.experimental.pallas import tpu as pltpu

EPS = 1e-5
NEG_BIG = -1e9  # finite "minus infinity" -> no -inf/NaN even when masks stack


def _ln(x, g, b):
    """LayerNorm over the last axis, f32 statistics."""
    mu = jnp.mean(x, axis=-1, keepdims=True)
    var = jnp.mean(jnp.square(x - mu), axis=-1, keepdims=True)
    return (x - mu) * jax.lax.rsqrt(var + EPS) * g + b


def _bf16(x):
    return x.astype(jnp.bfloat16)


# --------------------------- fused encoder kernel ---------------------------


def _clip_encoder_kernel(
    x_hbm_ref, bias_ref,
    ln1g_ref, ln1b_ref, wqkv_ref, bqkv_ref, wo_ref, bo_ref,
    ln2g_ref, ln2b_ref, w1_ref, b1_ref, w2_ref, b2_ref,
    lnfg_ref, lnfb_ref,
    o_ref,
    *, batch, seq, heads, head_dim,
):
    layer = pl.program_id(0)
    last = pl.num_programs(0) - 1
    hid = heads * head_dim
    rows = batch * seq

    # Layer 0: DMA the embedded tokens straight into the resident output block.
    # o_ref has a constant out-block index, so it stays in VMEM across the
    # whole layer grid and carries the activation between layers.
    @pl.when(layer == 0)
    def _():
        pltpu.sync_copy(x_hbm_ref, o_ref)

    x = o_ref[...]                                            # (B*S, H) f32

    # ---------------- self-attention block (pre-LN, fused) ----------------
    # scale = head_dim**-0.5 is already folded into the Q weights/bias.
    h = _ln(x, ln1g_ref[0], ln1b_ref[0])                      # (B*S, H)
    qkv = jnp.dot(_bf16(h), wqkv_ref[0],
                  preferred_element_type=jnp.float32) + bqkv_ref[0]  # (B*S, 3H)
    q = qkv[:, :hid].reshape(batch, seq, hid)
    k = qkv[:, hid:2 * hid].reshape(batch, seq, hid)
    v = qkv[:, 2 * hid:].reshape(batch, seq, hid)

    bias = bias_ref[...]                                      # (B, S, S)
    w_o = wo_ref[0]                                           # (H, H) bf16

    # Per-head attention, batched over B with a single leading batch dim.
    # The output projection is decomposed per head, so per-head results are
    # accumulated straight into the f32 residual (no (B*S, H) assembly slab,
    # no sub-128-lane masked stores, no per-batch row slicing).
    acc = x + bo_ref[0]                                       # residual + bo
    for hh in range(heads):                                   # small static loop
        c0 = hh * head_dim
        qh = _bf16(q[:, :, c0:c0 + head_dim])                 # (B, S, Dh)
        kh = _bf16(k[:, :, c0:c0 + head_dim])
        vh = _bf16(v[:, :, c0:c0 + head_dim])
        s = jnp.einsum("bqd,bkd->bqk", qh, kh,
                       preferred_element_type=jnp.float32) + bias   # (B, S, S)
        m = jnp.max(s, axis=-1, keepdims=True)
        p = jnp.exp(s - m)
        p = p * pl.reciprocal(jnp.sum(p, axis=-1, keepdims=True), approx=True)
        oh = jnp.einsum("bqk,bkd->bqd", _bf16(p), vh,
                        preferred_element_type=jnp.float32)          # (B, S, Dh)
        acc = acc + jnp.dot(_bf16(oh.reshape(rows, head_dim)),
                            w_o[c0:c0 + head_dim, :],
                            preferred_element_type=jnp.float32)
    x = acc

    # ---------------------- MLP block (pre-LN, fused) ----------------------
    h = _ln(x, ln2g_ref[0], ln2b_ref[0])
    h1 = jnp.dot(_bf16(h), w1_ref[0],
                 preferred_element_type=jnp.float32) + b1_ref[0]
    h1 = h1 * jax.nn.sigmoid(1.702 * h1)                      # QuickGELU, f32
    x = x + jnp.dot(_bf16(h1), w2_ref[0],
                    preferred_element_type=jnp.float32) + b2_ref[0]

    # Carry to the next layer; final LayerNorm only on the last layer.
    @pl.when(layer != last)
    def _():
        o_ref[...] = x

    @pl.when(layer == last)
    def _():
        o_ref[...] = _ln(x, lnfg_ref[...], lnfb_ref[...])


def clip_text_forward(params, input_ids, attention_mask, *, heads):
    B, S = input_ids.shape
    H = params["token_emb"].shape[1]
    assert H % heads == 0
    Dh = H // heads
    scale = Dh ** -0.5
    L = params["wqkv"].shape[0]
    I = params["w1"].shape[2]

    # Pad seq to a sublane multiple so per-batch row groups are tile-aligned.
    S_pad = ((S + 7) // 8) * 8
    R = B * S_pad

    # Embeddings (gather) stay in plain JAX glue.
    x = jnp.take(params["token_emb"], input_ids, axis=0) + params["pos_emb"][:S][None]
    if S_pad != S:
        x = jnp.pad(x, ((0, 0), (0, S_pad - S), (0, 0)))
    x2d = x.reshape(R, H).astype(jnp.float32)

    # Additive causal + key-padding bias (tiny, constant-index VMEM resident).
    # Padded key columns are masked so pad positions never leak into softmax.
    am = attention_mask.astype(jnp.float32)
    if S_pad != S:
        am = jnp.pad(am, ((0, 0), (0, S_pad - S)))
    negpad = (1.0 - am) * jnp.float32(NEG_BIG)                 # (B, S_pad)
    causal = jnp.where(jnp.arange(S_pad)[None, :] > jnp.arange(S_pad)[:, None],
                       jnp.float32(NEG_BIG), jnp.float32(0.0))
    bias = causal[None] + negpad[:, None, :]                   # (B, S_pad, S_pad)

    # Fold scale into the Q third of the fused QKV weights/bias (one-time,
    # JAX-side): removes a (B*S, H) VPU multiply from every layer.
    colscale = jnp.concatenate([jnp.full((H,), scale, jnp.float32),
                                jnp.ones((2 * H,), jnp.float32)])
    wqkv = (params["wqkv"].astype(jnp.float32) * colscale).astype(jnp.bfloat16)
    bqkv = params["bqkv"] * colscale

    kern = functools.partial(
        _clip_encoder_kernel, batch=B, seq=S_pad, heads=heads, head_dim=Dh,
    )

    per_layer = lambda l: (l, 0, 0)
    whole2d = lambda l: (0, 0)
    whole3d = lambda l: (0, 0, 0)

    # Explicit VMEM budget: double-buffered per-layer weights + activation
    # slabs + bias + slack, clamped to [16 MiB, 64 MiB].
    w_bytes = 2 * (H * 3 * H + H * H + H * I + I * H)          # bf16 per layer
    est = (2 * w_bytes                                         # 2 pipeline bufs
           + 4 * R * (4 * H + 3 * H + I)                       # f32 activations
           + 4 * B * S_pad * S_pad                             # bias
           + (4 << 20))                                        # slack
    vmem_limit = int(min(64 << 20, max(est, 16 << 20)))

    out = pl.pallas_call(
        kern,
        out_shape=jax.ShapeDtypeStruct((R, H), jnp.float32),
        grid_spec=pltpu.PrefetchScalarGridSpec(
            num_scalar_prefetch=0,
            grid=(L,),
            in_specs=[
                pl.BlockSpec(memory_space=pl.ANY),          # embedded tokens (HBM)
                pl.BlockSpec((B, S_pad, S_pad), whole3d),   # causal+pad bias
                pl.BlockSpec((1, 1, H), per_layer),         # ln1 gamma
                pl.BlockSpec((1, 1, H), per_layer),         # ln1 beta
                pl.BlockSpec((1, H, 3 * H), per_layer),     # fused Wqkv (bf16)
                pl.BlockSpec((1, 1, 3 * H), per_layer),     # fused bqkv
                pl.BlockSpec((1, H, H), per_layer),         # Wo (bf16)
                pl.BlockSpec((1, 1, H), per_layer),         # bo
                pl.BlockSpec((1, 1, H), per_layer),         # ln2 gamma
                pl.BlockSpec((1, 1, H), per_layer),         # ln2 beta
                pl.BlockSpec((1, H, I), per_layer),         # W1 (bf16)
                pl.BlockSpec((1, 1, I), per_layer),         # b1
                pl.BlockSpec((1, I, H), per_layer),         # W2 (bf16)
                pl.BlockSpec((1, 1, H), per_layer),         # b2
                pl.BlockSpec((1, H), whole2d),              # final LN gamma
                pl.BlockSpec((1, H), whole2d),              # final LN beta
            ],
            out_specs=pl.BlockSpec((R, H), whole2d),        # resident carry
        ),
        compiler_params=pltpu.CompilerParams(
            dimension_semantics=("arbitrary",),             # layers are sequential
            vmem_limit_bytes=vmem_limit,
        ),
    )(
        x2d, bias,
        params["ln1_g"], params["ln1_b"], wqkv, bqkv,
        params["wo"], params["bo"], params["ln2_g"], params["ln2_b"],
        params["w1"], params["b1"], params["w2"], params["b2"],
        params["lnf_g"], params["lnf_b"],
    )
    return out.reshape(B, S_pad, H)[:, :S]  # last_hidden_state


# ------------------------- pure-JAX reference check -------------------------


def clip_text_forward_ref(params, input_ids, attention_mask, *, heads):
    B, S = input_ids.shape
    H = params["token_emb"].shape[1]
    Dh = H // heads
    scale = Dh ** -0.5
    L = params["wqkv"].shape[0]

    def mm(a, w):
        return jnp.dot(a.astype(jnp.bfloat16), w,
                       preferred_element_type=jnp.float32)

    x = jnp.take(params["token_emb"], input_ids, axis=0) + params["pos_emb"][:S][None]
    x = x.astype(jnp.float32)
    negpad = (1.0 - attention_mask.astype(jnp.float32)) * jnp.float32(NEG_BIG)
    causal = jnp.where(jnp.arange(S)[None, :] > jnp.arange(S)[:, None],
                       jnp.float32(NEG_BIG), jnp.float32(0.0))
    bias = causal[None] + negpad[:, None, :]                  # (B, S, S)

    def split(t):
        return t.reshape(B, S, heads, Dh).transpose(0, 2, 1, 3)

    for l in range(L):
        res = x
        h = _ln(x, params["ln1_g"][l], params["ln1_b"][l])
        qkv = mm(h.reshape(B * S, H), params["wqkv"][l]).reshape(B, S, 3 * H)
        qkv = qkv + params["bqkv"][l]
        q, k, v = qkv[..., :H] * scale, qkv[..., H:2 * H], qkv[..., 2 * H:]
        qh, kh, vh = split(q), split(k), split(v)
        s = jnp.einsum("bhqd,bhkd->bhqk", qh.astype(jnp.bfloat16),
                       kh.astype(jnp.bfloat16),
                       preferred_element_type=jnp.float32) + bias[:, None]
        m = jnp.max(s, axis=-1, keepdims=True)
        p = jnp.exp(s - m)
        p = p / jnp.sum(p, axis=-1, keepdims=True)
        o = jnp.einsum("bhqk,bhkd->bhqd", p.astype(jnp.bfloat16),
                       vh.astype(jnp.bfloat16),
                       preferred_element_type=jnp.float32)
        o = o.transpose(0, 2, 1, 3).reshape(B, S, H)
        o = mm(o.reshape(B * S, H), params["wo"][l]).reshape(B, S, H) + params["bo"][l]
        x = res + o

        res = x
        h = _ln(x, params["ln2_g"][l], params["ln2_b"][l])
        h1 = mm(h.reshape(B * S, H), params["w1"][l]).reshape(B, S, -1) + params["b1"][l]
        h1 = h1 * jax.nn.sigmoid(1.702 * h1)
        h2 = mm(h1.reshape(B * S, -1), params["w2"][l]).reshape(B, S, H) + params["b2"][l]
        x = res + h2

    return _ln(x, params["lnf_g"], params["lnf_b"])


# -------------------------------- params ------------------------------------


def init_params(key, *, vocab, hidden, heads, inter, layers, max_pos):
    ks = jax.random.split(key, 6)

    def nrm(k, shape, dtype=jnp.float32):
        return (0.02 * jax.random.normal(k, shape, dtype=jnp.float32)).astype(dtype)

    return {
        "token_emb": nrm(ks[0], (vocab, hidden)),
        "pos_emb": nrm(ks[1], (max_pos, hidden)),
        "ln1_g": jnp.ones((layers, 1, hidden), jnp.float32),
        "ln1_b": jnp.zeros((layers, 1, hidden), jnp.float32),
        "wqkv": nrm(ks[2], (layers, hidden, 3 * hidden), jnp.bfloat16),
        "bqkv": jnp.zeros((layers, 1, 3 * hidden), jnp.float32),
        "wo": nrm(ks[3], (layers, hidden, hidden), jnp.bfloat16),
        "bo": jnp.zeros((layers, 1, hidden), jnp.float32),
        "ln2_g": jnp.ones((layers, 1, hidden), jnp.float32),
        "ln2_b": jnp.zeros((layers, 1, hidden), jnp.float32),
        "w1": nrm(ks[4], (layers, hidden, inter), jnp.bfloat16),
        "b1": jnp.zeros((layers, 1, inter), jnp.float32),
        "w2": nrm(ks[5], (layers, inter, hidden), jnp.bfloat16),
        "b2": jnp.zeros((layers, 1, hidden), jnp.float32),
        "lnf_g": jnp.ones((1, hidden), jnp.float32),
        "lnf_b": jnp.zeros((1, hidden), jnp.float32),
    }


# --------------------------------- main --------------------------------------

if __name__ == "__main__":
    # Small, CLIP-text-shaped config (real model: vocab 49408, hidden 768,
    # 12 heads, 12 layers, seq 77 -- scaled down here).  Don't benchmark at
    # this config; validate perf at H=768, I=3072, S->80, L=12.
    BATCH, SEQ = 2, 8
    VOCAB, HIDDEN, HEADS, INTER, LAYERS = 100, 32, 4, 128, 2

    key = jax.random.PRNGKey(0)
    k_param, k_ids = jax.random.split(key)

    params = init_params(
        k_param, vocab=VOCAB, hidden=HIDDEN, heads=HEADS,
        inter=INTER, layers=LAYERS, max_pos=SEQ,
    )

    input_ids = jax.random.randint(k_ids, (BATCH, SEQ), 0, VOCAB, dtype=jnp.int32)
    # Emulate tokenizer padding: second sequence has 2 padding positions.
    attention_mask = jnp.array(
        [[1] * SEQ, [1] * (SEQ - 2) + [0] * 2], dtype=jnp.int32
    )

    fwd = jax.jit(functools.partial(clip_text_forward, heads=HEADS))
    out = jax.block_until_ready(fwd(params, input_ids, attention_mask))

    assert out.shape == (BATCH, SEQ, HIDDEN), out.shape
    assert out.dtype == jnp.float32
    assert bool(jnp.all(jnp.isfinite(out)))

    # Numerical sanity check against a pure-JAX reference with the original
    # (HF-style) math: explicit Q scaling, exact softmax divide.
    ref = jax.block_until_ready(
        clip_text_forward_ref(params, input_ids, attention_mask, heads=HEADS)
    )
    max_err = float(jnp.max(jnp.abs(out - ref)))
    assert max_err < 5e-2, f"max |kernel - ref| = {max_err}"

    print("KERNEL_OK")
</pallas_src>

<mosaic_0001>
module attributes {stable_mosaic.version = 11 : i64} {
  func.func @_clip_encoder_kernel(%arg0: i32, %arg1: memref<16x32xf32, #tpu.memory_space<any>>, %arg2: memref<2x8x8xf32, #tpu.memory_space<vmem>>, %arg3: memref<1x1x32xf32, #tpu.memory_space<vmem>>, %arg4: memref<1x1x32xf32, #tpu.memory_space<vmem>>, %arg5: memref<1x32x96xbf16, #tpu.memory_space<vmem>>, %arg6: memref<1x1x96xf32, #tpu.memory_space<vmem>>, %arg7: memref<1x32x32xbf16, #tpu.memory_space<vmem>>, %arg8: memref<1x1x32xf32, #tpu.memory_space<vmem>>, %arg9: memref<1x1x32xf32, #tpu.memory_space<vmem>>, %arg10: memref<1x1x32xf32, #tpu.memory_space<vmem>>, %arg11: memref<1x32x128xbf16, #tpu.memory_space<vmem>>, %arg12: memref<1x1x128xf32, #tpu.memory_space<vmem>>, %arg13: memref<1x128x32xbf16, #tpu.memory_space<vmem>>, %arg14: memref<1x1x32xf32, #tpu.memory_space<vmem>>, %arg15: memref<1x32xf32, #tpu.memory_space<vmem>>, %arg16: memref<1x32xf32, #tpu.memory_space<vmem>>, %arg17: memref<16x32xf32, #tpu.memory_space<vmem>>) attributes {dimension_semantics = [#tpu.dimension_semantics<arbitrary>], iteration_bounds = array<i64: 2>, scalar_prefetch = 0 : i64, scratch_operands = 0 : i64, tpu.core_type = #tpu.core_type<tc>, window_params = [{}, {pipeline_mode = #tpu.pipeline_mode<synchronous>, transform_indices = @transform_1, window_bounds = array<i64: 2, 8, 8>}, {transform_indices = @transform_2, window_bounds = array<i64: 1, 1, 32>}, {transform_indices = @transform_3, window_bounds = array<i64: 1, 1, 32>}, {transform_indices = @transform_4, window_bounds = array<i64: 1, 32, 96>}, {transform_indices = @transform_5, window_bounds = array<i64: 1, 1, 96>}, {transform_indices = @transform_6, window_bounds = array<i64: 1, 32, 32>}, {transform_indices = @transform_7, window_bounds = array<i64: 1, 1, 32>}, {transform_indices = @transform_8, window_bounds = array<i64: 1, 1, 32>}, {transform_indices = @transform_9, window_bounds = array<i64: 1, 1, 32>}, {transform_indices = @transform_10, window_bounds = array<i64: 1, 32, 128>}, {transform_indices = @transform_11, window_bounds = array<i64: 1, 1, 128>}, {transform_indices = @transform_12, window_bounds = array<i64: 1, 128, 32>}, {transform_indices = @transform_13, window_bounds = array<i64: 1, 1, 32>}, {pipeline_mode = #tpu.pipeline_mode<synchronous>, transform_indices = @transform_14, window_bounds = array<i64: 1, 32>}, {pipeline_mode = #tpu.pipeline_mode<synchronous>, transform_indices = @transform_15, window_bounds = array<i64: 1, 32>}, {pipeline_mode = #tpu.pipeline_mode<synchronous>, transform_indices = @transform_16, window_bounds = array<i64: 16, 32>}]} {
    %c0_i32 = arith.constant 0 : i32
    %0 = arith.cmpi eq, %arg0, %c0_i32 : i32
    %1 = arith.extui %0 : i1 to i32
    %c0_i32_0 = arith.constant 0 : i32
    %2 = arith.cmpi ne, %1, %c0_i32_0 : i32
    scf.if %2 {
      "tpu.region"() ({
        %208 = tpu.sem_alloc : memref<!tpu.dma_semaphore, #tpu.memory_space<semaphore_mem>>
        tpu.enqueue_dma source(%arg1 : memref<16x32xf32, #tpu.memory_space<any>>) target(%arg17 : memref<16x32xf32, #tpu.memory_space<vmem>>) target_semaphore(%208 : memref<!tpu.dma_semaphore, #tpu.memory_space<semaphore_mem>>)
        tpu.wait_dma2 semaphore(%208 : memref<!tpu.dma_semaphore, #tpu.memory_space<semaphore_mem>>) src(%arg1 : memref<16x32xf32, #tpu.memory_space<any>>) dst(%arg17 : memref<16x32xf32, #tpu.memory_space<vmem>>)
        tpu.yield
      }) : () -> ()
    } else {
    }
    %c0 = arith.constant 0 : index
    %c0_1 = arith.constant 0 : index
    %3 = vector.load %arg17[%c0, %c0_1] : memref<16x32xf32, #tpu.memory_space<vmem>>, vector<16x32xf32>
    %c0_2 = arith.constant 0 : index
    %c0_3 = arith.constant 0 : index
    %c0_4 = arith.constant 0 : index
    %4 = vector.load %arg3[%c0_2, %c0_3, %c0_4] : memref<1x1x32xf32, #tpu.memory_space<vmem>>, vector<1x1x32xf32>
    %5 = vector.shape_cast %4 : vector<1x1x32xf32> to vector<1x32xf32>
    %c0_5 = arith.constant 0 : index
    %c0_6 = arith.constant 0 : index
    %c0_7 = arith.constant 0 : index
    %6 = vector.load %arg4[%c0_5, %c0_6, %c0_7] : memref<1x1x32xf32, #tpu.memory_space<vmem>>, vector<1x1x32xf32>
    %7 = vector.shape_cast %6 : vector<1x1x32xf32> to vector<1x32xf32>
    %cst = arith.constant dense<0.000000e+00> : vector<16xf32>
    %8 = vector.multi_reduction <add>, %3, %cst [1] : vector<16x32xf32> to vector<16xf32>
    %9 = vector.shape_cast %8 : vector<16xf32> to vector<16x1xf32>
    %cst_8 = arith.constant 3.200000e+01 : f32
    %10 = vector.broadcast %cst_8 : f32 to vector<16x1xf32>
    %11 = arith.divf %9, %10 : vector<16x1xf32>
    %12 = vector.broadcast %11 : vector<16x1xf32> to vector<16x32xf32>
    %13 = arith.subf %3, %12 : vector<16x32xf32>
    %14 = arith.mulf %13, %13 : vector<16x32xf32>
    %cst_9 = arith.constant dense<0.000000e+00> : vector<16xf32>
    %15 = vector.multi_reduction <add>, %14, %cst_9 [1] : vector<16x32xf32> to vector<16xf32>
    %16 = vector.shape_cast %15 : vector<16xf32> to vector<16x1xf32>
    %cst_10 = arith.constant 3.200000e+01 : f32
    %17 = vector.broadcast %cst_10 : f32 to vector<16x1xf32>
    %18 = arith.divf %16, %17 : vector<16x1xf32>
    %19 = vector.broadcast %11 : vector<16x1xf32> to vector<16x32xf32>
    %20 = arith.subf %3, %19 : vector<16x32xf32>
    %cst_11 = arith.constant 9.99999974E-6 : f32
    %21 = vector.broadcast %cst_11 : f32 to vector<16x1xf32>
    %22 = arith.addf %18, %21 : vector<16x1xf32>
    %23 = math.rsqrt %22 : vector<16x1xf32>
    %24 = vector.broadcast %23 : vector<16x1xf32> to vector<16x32xf32>
    %25 = arith.mulf %20, %24 : vector<16x32xf32>
    %26 = vector.broadcast %5 : vector<1x32xf32> to vector<16x32xf32>
    %27 = arith.mulf %25, %26 : vector<16x32xf32>
    %28 = vector.broadcast %7 : vector<1x32xf32> to vector<16x32xf32>
    %29 = arith.addf %27, %28 : vector<16x32xf32>
    %30 = arith.truncf %29 : vector<16x32xf32> to vector<16x32xbf16>
    %c0_12 = arith.constant 0 : index
    %c0_13 = arith.constant 0 : index
    %c0_14 = arith.constant 0 : index
    %31 = vector.load %arg5[%c0_12, %c0_13, %c0_14] : memref<1x32x96xbf16, #tpu.memory_space<vmem>>, vector<1x32x96xbf16>
    %32 = vector.shape_cast %31 : vector<1x32x96xbf16> to vector<32x96xbf16>
    %cst_15 = arith.constant dense<0.000000e+00> : vector<16x96xf32>
    %33 = tpu.matmul %30, %32, %cst_15 {dimension_numbers = #tpu.dot_dimension_numbers<[1], [0], [0], [1], [0, 0, 1, 1], [], []>} : vector<16x32xbf16>, vector<32x96xbf16>, vector<16x96xf32> -> vector<16x96xf32>
    %c0_16 = arith.constant 0 : index
    %c0_17 = arith.constant 0 : index
    %c0_18 = arith.constant 0 : index
    %34 = vector.load %arg6[%c0_16, %c0_17, %c0_18] : memref<1x1x96xf32, #tpu.memory_space<vmem>>, vector<1x1x96xf32>
    %35 = vector.shape_cast %34 : vector<1x1x96xf32> to vector<1x96xf32>
    %36 = vector.broadcast %35 : vector<1x96xf32> to vector<16x96xf32>
    %37 = arith.addf %33, %36 : vector<16x96xf32>
    %38 = vector.extract_strided_slice %37 {offsets = [0, 0], sizes = [16, 32], strides = [1, 1]} : vector<16x96xf32> to vector<16x32xf32>
    %39 = vector.shape_cast %38 : vector<16x32xf32> to vector<2x8x32xf32>
    %40 = vector.extract_strided_slice %37 {offsets = [0, 32], sizes = [16, 32], strides = [1, 1]} : vector<16x96xf32> to vector<16x32xf32>
    %41 = vector.shape_cast %40 : vector<16x32xf32> to vector<2x8x32xf32>
    %42 = vector.extract_strided_slice %37 {offsets = [0, 64], sizes = [16, 32], strides = [1, 1]} : vector<16x96xf32> to vector<16x32xf32>
    %43 = vector.shape_cast %42 : vector<16x32xf32> to vector<2x8x32xf32>
    %c0_19 = arith.constant 0 : index
    %c0_20 = arith.constant 0 : index
    %c0_21 = arith.constant 0 : index
    %44 = vector.load %arg2[%c0_19, %c0_20, %c0_21] : memref<2x8x8xf32, #tpu.memory_space<vmem>>, vector<2x8x8xf32>
    %c0_22 = arith.constant 0 : index
    %c0_23 = arith.constant 0 : index
    %c0_24 = arith.constant 0 : index
    %45 = vector.load %arg7[%c0_22, %c0_23, %c0_24] : memref<1x32x32xbf16, #tpu.memory_space<vmem>>, vector<1x32x32xbf16>
    %46 = vector.shape_cast %45 : vector<1x32x32xbf16> to vector<32x32xbf16>
    %c0_25 = arith.constant 0 : index
    %c0_26 = arith.constant 0 : index
    %c0_27 = arith.constant 0 : index
    %47 = vector.load %arg8[%c0_25, %c0_26, %c0_27] : memref<1x1x32xf32, #tpu.memory_space<vmem>>, vector<1x1x32xf32>
    %48 = vector.shape_cast %47 : vector<1x1x32xf32> to vector<1x32xf32>
    %49 = vector.broadcast %48 : vector<1x32xf32> to vector<16x32xf32>
    %50 = arith.addf %3, %49 : vector<16x32xf32>
    %51 = vector.extract_strided_slice %39 {offsets = [0, 0, 0], sizes = [2, 8, 8], strides = [1, 1, 1]} : vector<2x8x32xf32> to vector<2x8x8xf32>
    %52 = arith.truncf %51 : vector<2x8x8xf32> to vector<2x8x8xbf16>
    %53 = vector.extract_strided_slice %41 {offsets = [0, 0, 0], sizes = [2, 8, 8], strides = [1, 1, 1]} : vector<2x8x32xf32> to vector<2x8x8xf32>
    %54 = arith.truncf %53 : vector<2x8x8xf32> to vector<2x8x8xbf16>
    %55 = vector.extract_strided_slice %43 {offsets = [0, 0, 0], sizes = [2, 8, 8], strides = [1, 1, 1]} : vector<2x8x32xf32> to vector<2x8x8xf32>
    %56 = arith.truncf %55 : vector<2x8x8xf32> to vector<2x8x8xbf16>
    "tpu.trace_start"() <{level = 10 : i32, message = "bqd,bkd->bqk"}> : () -> ()
    %cst_28 = arith.constant dense<0.000000e+00> : vector<2x8x8xf32>
    %57 = tpu.matmul %52, %54, %cst_28 {dimension_numbers = #tpu.dot_dimension_numbers<[2], [2], [1], [1], [0, 0, 0, 1, 1, 1], [0], [0]>} : vector<2x8x8xbf16>, vector<2x8x8xbf16>, vector<2x8x8xf32> -> vector<2x8x8xf32>
    "tpu.trace_stop"() : () -> ()
    %58 = arith.addf %57, %44 : vector<2x8x8xf32>
    %cst_29 = arith.constant dense<0xFF800000> : vector<2x8xf32>
    %59 = vector.multi_reduction <maximumf>, %58, %cst_29 [2] : vector<2x8x8xf32> to vector<2x8xf32>
    %60 = vector.shape_cast %59 : vector<2x8xf32> to vector<2x8x1xf32>
    %61 = vector.broadcast %60 : vector<2x8x1xf32> to vector<2x8x8xf32>
    %62 = arith.subf %58, %61 : vector<2x8x8xf32>
    %63 = math.exp %62 : vector<2x8x8xf32>
    %cst_30 = arith.constant dense<0.000000e+00> : vector<2x8xf32>
    %64 = vector.multi_reduction <add>, %63, %cst_30 [2] : vector<2x8x8xf32> to vector<2x8xf32>
    %65 = vector.shape_cast %64 : vector<2x8xf32> to vector<2x8x1xf32>
    %66 = tpu.reciprocal %65 {approx = true} : vector<2x8x1xf32> -> vector<2x8x1xf32>
    %67 = vector.broadcast %66 : vector<2x8x1xf32> to vector<2x8x8xf32>
    %68 = arith.mulf %63, %67 : vector<2x8x8xf32>
    %69 = arith.truncf %68 : vector<2x8x8xf32> to vector<2x8x8xbf16>
    "tpu.trace_start"() <{level = 10 : i32, message = "bqk,bkd->bqd"}> : () -> ()
    %cst_31 = arith.constant dense<0.000000e+00> : vector<2x8x8xf32>
    %70 = tpu.matmul %69, %56, %cst_31 {dimension_numbers = #tpu.dot_dimension_numbers<[2], [1], [1], [2], [0, 0, 0, 1, 1, 2], [0], [0]>} : vector<2x8x8xbf16>, vector<2x8x8xbf16>, vector<2x8x8xf32> -> vector<2x8x8xf32>
    "tpu.trace_stop"() : () -> ()
    %71 = vector.shape_cast %70 : vector<2x8x8xf32> to vector<16x8xf32>
    %72 = arith.truncf %71 : vector<16x8xf32> to vector<16x8xbf16>
    %73 = vector.extract_strided_slice %46 {offsets = [0, 0], sizes = [8, 32], strides = [1, 1]} : vector<32x32xbf16> to vector<8x32xbf16>
    %cst_32 = arith.constant dense<0.000000e+00> : vector<16x32xf32>
    %74 = tpu.matmul %72, %73, %cst_32 {dimension_numbers = #tpu.dot_dimension_numbers<[1], [0], [0], [1], [0, 0, 1, 1], [], []>} : vector<16x8xbf16>, vector<8x32xbf16>, vector<16x32xf32> -> vector<16x32xf32>
    %75 = arith.addf %50, %74 : vector<16x32xf32>
    %76 = vector.extract_strided_slice %39 {offsets = [0, 0, 8], sizes = [2, 8, 8], strides = [1, 1, 1]} : vector<2x8x32xf32> to vector<2x8x8xf32>
    %77 = arith.truncf %76 : vector<2x8x8xf32> to vector<2x8x8xbf16>
    %78 = vector.extract_strided_slice %41 {offsets = [0, 0, 8], sizes = [2, 8, 8], strides = [1, 1, 1]} : vector<2x8x32xf32> to vector<2x8x8xf32>
    %79 = arith.truncf %78 : vector<2x8x8xf32> to vector<2x8x8xbf16>
    %80 = vector.extract_strided_slice %43 {offsets = [0, 0, 8], sizes = [2, 8, 8], strides = [1, 1, 1]} : vector<2x8x32xf32> to vector<2x8x8xf32>
    %81 = arith.truncf %80 : vector<2x8x8xf32> to vector<2x8x8xbf16>
    "tpu.trace_start"() <{level = 10 : i32, message = "bqd,bkd->bqk"}> : () -> ()
    %cst_33 = arith.constant dense<0.000000e+00> : vector<2x8x8xf32>
    %82 = tpu.matmul %77, %79, %cst_33 {dimension_numbers = #tpu.dot_dimension_numbers<[2], [2], [1], [1], [0, 0, 0, 1, 1, 1], [0], [0]>} : vector<2x8x8xbf16>, vector<2x8x8xbf16>, vector<2x8x8xf32> -> vector<2x8x8xf32>
    "tpu.trace_stop"() : () -> ()
    %83 = arith.addf %82, %44 : vector<2x8x8xf32>
    %cst_34 = arith.constant dense<0xFF800000> : vector<2x8xf32>
    %84 = vector.multi_reduction <maximumf>, %83, %cst_34 [2] : vector<2x8x8xf32> to vector<2x8xf32>
    %85 = vector.shape_cast %84 : vector<2x8xf32> to vector<2x8x1xf32>
    %86 = vector.broadcast %85 : vector<2x8x1xf32> to vector<2x8x8xf32>
    %87 = arith.subf %83, %86 : vector<2x8x8xf32>
    %88 = math.exp %87 : vector<2x8x8xf32>
    %cst_35 = arith.constant dense<0.000000e+00> : vector<2x8xf32>
    %89 = vector.multi_reduction <add>, %88, %cst_35 [2] : vector<2x8x8xf32> to vector<2x8xf32>
    %90 = vector.shape_cast %89 : vector<2x8xf32> to vector<2x8x1xf32>
    %91 = tpu.reciprocal %90 {approx = true} : vector<2x8x1xf32> -> vector<2x8x1xf32>
    %92 = vector.broadcast %91 : vector<2x8x1xf32> to vector<2x8x8xf32>
    %93 = arith.mulf %88, %92 : vector<2x8x8xf32>
    %94 = arith.truncf %93 : vector<2x8x8xf32> to vector<2x8x8xbf16>
    "tpu.trace_start"() <{level = 10 : i32, message = "bqk,bkd->bqd"}> : () -> ()
    %cst_36 = arith.constant dense<0.000000e+00> : vector<2x8x8xf32>
    %95 = tpu.matmul %94, %81, %cst_36 {dimension_numbers = #tpu.dot_dimension_numbers<[2], [1], [1], [2], [0, 0, 0, 1, 1, 2], [0], [0]>} : vector<2x8x8xbf16>, vector<2x8x8xbf16>, vector<2x8x8xf32> -> vector<2x8x8xf32>
    "tpu.trace_stop"() : () -> ()
    %96 = vector.shape_cast %95 : vector<2x8x8xf32> to vector<16x8xf32>
    %97 = arith.truncf %96 : vector<16x8xf32> to vector<16x8xbf16>
    %98 = vector.extract_strided_slice %46 {offsets = [8, 0], sizes = [8, 32], strides = [1, 1]} : vector<32x32xbf16> to vector<8x32xbf16>
    %cst_37 = arith.constant dense<0.000000e+00> : vector<16x32xf32>
    %99 = tpu.matmul %97, %98, %cst_37 {dimension_numbers = #tpu.dot_dimension_numbers<[1], [0], [0], [1], [0, 0, 1, 1], [], []>} : vector<16x8xbf16>, vector<8x32xbf16>, vector<16x32xf32> -> vector<16x32xf32>
    %100 = arith.addf %75, %99 : vector<16x32xf32>
    %101 = vector.extract_strided_slice %39 {offsets = [0, 0, 16], sizes = [2, 8, 8], strides = [1, 1, 1]} : vector<2x8x32xf32> to vector<2x8x8xf32>
    %102 = arith.truncf %101 : vector<2x8x8xf32> to vector<2x8x8xbf16>
    %103 = vector.extract_strided_slice %41 {offsets = [0, 0, 16], sizes = [2, 8, 8], strides = [1, 1, 1]} : vector<2x8x32xf32> to vector<2x8x8xf32>
    %104 = arith.truncf %103 : vector<2x8x8xf32> to vector<2x8x8xbf16>
    %105 = vector.extract_strided_slice %43 {offsets = [0, 0, 16], sizes = [2, 8, 8], strides = [1, 1, 1]} : vector<2x8x32xf32> to vector<2x8x8xf32>
    %106 = arith.truncf %105 : vector<2x8x8xf32> to vector<2x8x8xbf16>
    "tpu.trace_start"() <{level = 10 : i32, message = "bqd,bkd->bqk"}> : () -> ()
    %cst_38 = arith.constant dense<0.000000e+00> : vector<2x8x8xf32>
    %107 = tpu.matmul %102, %104, %cst_38 {dimension_numbers = #tpu.dot_dimension_numbers<[2], [2], [1], [1], [0, 0, 0, 1, 1, 1], [0], [0]>} : vector<2x8x8xbf16>, vector<2x8x8xbf16>, vector<2x8x8xf32> -> vector<2x8x8xf32>
    "tpu.trace_stop"() : () -> ()
    %108 = arith.addf %107, %44 : vector<2x8x8xf32>
    %cst_39 = arith.constant dense<0xFF800000> : vector<2x8xf32>
    %109 = vector.multi_reduction <maximumf>, %108, %cst_39 [2] : vector<2x8x8xf32> to vector<2x8xf32>
    %110 = vector.shape_cast %109 : vector<2x8xf32> to vector<2x8x1xf32>
    %111 = vector.broadcast %110 : vector<2x8x1xf32> to vector<2x8x8xf32>
    %112 = arith.subf %108, %111 : vector<2x8x8xf32>
    %113 = math.exp %112 : vector<2x8x8xf32>
    %cst_40 = arith.constant dense<0.000000e+00> : vector<2x8xf32>
    %114 = vector.multi_reduction <add>, %113, %cst_40 [2] : vector<2x8x8xf32> to vector<2x8xf32>
    %115 = vector.shape_cast %114 : vector<2x8xf32> to vector<2x8x1xf32>
    %116 = tpu.reciprocal %115 {approx = true} : vector<2x8x1xf32> -> vector<2x8x1xf32>
    %117 = vector.broadcast %116 : vector<2x8x1xf32> to vector<2x8x8xf32>
    %118 = arith.mulf %113, %117 : vector<2x8x8xf32>
    %119 = arith.truncf %118 : vector<2x8x8xf32> to vector<2x8x8xbf16>
    "tpu.trace_start"() <{level = 10 : i32, message = "bqk,bkd->bqd"}> : () -> ()
    %cst_41 = arith.constant dense<0.000000e+00> : vector<2x8x8xf32>
    %120 = tpu.matmul %119, %106, %cst_41 {dimension_numbers = #tpu.dot_dimension_numbers<[2], [1], [1], [2], [0, 0, 0, 1, 1, 2], [0], [0]>} : vector<2x8x8xbf16>, vector<2x8x8xbf16>, vector<2x8x8xf32> -> vector<2x8x8xf32>
    "tpu.trace_stop"() : () -> ()
    %121 = vector.shape_cast %120 : vector<2x8x8xf32> to vector<16x8xf32>
    %122 = arith.truncf %121 : vector<16x8xf32> to vector<16x8xbf16>
    %123 = vector.extract_strided_slice %46 {offsets = [16, 0], sizes = [8, 32], strides = [1, 1]} : vector<32x32xbf16> to vector<8x32xbf16>
    %cst_42 = arith.constant dense<0.000000e+00> : vector<16x32xf32>
    %124 = tpu.matmul %122, %123, %cst_42 {dimension_numbers = #tpu.dot_dimension_numbers<[1], [0], [0], [1], [0, 0, 1, 1], [], []>} : vector<16x8xbf16>, vector<8x32xbf16>, vector<16x32xf32> -> vector<16x32xf32>
    %125 = arith.addf %100, %124 : vector<16x32xf32>
    %126 = vector.extract_strided_slice %39 {offsets = [0, 0, 24], sizes = [2, 8, 8], strides = [1, 1, 1]} : vector<2x8x32xf32> to vector<2x8x8xf32>
    %127 = arith.truncf %126 : vector<2x8x8xf32> to vector<2x8x8xbf16>
    %128 = vector.extract_strided_slice %41 {offsets = [0, 0, 24], sizes = [2, 8, 8], strides = [1, 1, 1]} : vector<2x8x32xf32> to vector<2x8x8xf32>
    %129 = arith.truncf %128 : vector<2x8x8xf32> to vector<2x8x8xbf16>
    %130 = vector.extract_strided_slice %43 {offsets = [0, 0, 24], sizes = [2, 8, 8], strides = [1, 1, 1]} : vector<2x8x32xf32> to vector<2x8x8xf32>
    %131 = arith.truncf %130 : vector<2x8x8xf32> to vector<2x8x8xbf16>
    "tpu.trace_start"() <{level = 10 : i32, message = "bqd,bkd->bqk"}> : () -> ()
    %cst_43 = arith.constant dense<0.000000e+00> : vector<2x8x8xf32>
    %132 = tpu.matmul %127, %129, %cst_43 {dimension_numbers = #tpu.dot_dimension_numbers<[2], [2], [1], [1], [0, 0, 0, 1, 1, 1], [0], [0]>} : vector<2x8x8xbf16>, vector<2x8x8xbf16>, vector<2x8x8xf32> -> vector<2x8x8xf32>
    "tpu.trace_stop"() : () -> ()
    %133 = arith.addf %132, %44 : vector<2x8x8xf32>
    %cst_44 = arith.constant dense<0xFF800000> : vector<2x8xf32>
    %134 = vector.multi_reduction <maximumf>, %133, %cst_44 [2] : vector<2x8x8xf32> to vector<2x8xf32>
    %135 = vector.shape_cast %134 : vector<2x8xf32> to vector<2x8x1xf32>
    %136 = vector.broadcast %135 : vector<2x8x1xf32> to vector<2x8x8xf32>
    %137 = arith.subf %133, %136 : vector<2x8x8xf32>
    %138 = math.exp %137 : vector<2x8x8xf32>
    %cst_45 = arith.constant dense<0.000000e+00> : vector<2x8xf32>
    %139 = vector.multi_reduction <add>, %138, %cst_45 [2] : vector<2x8x8xf32> to vector<2x8xf32>
    %140 = vector.shape_cast %139 : vector<2x8xf32> to vector<2x8x1xf32>
    %141 = tpu.reciprocal %140 {approx = true} : vector<2x8x1xf32> -> vector<2x8x1xf32>
    %142 = vector.broadcast %141 : vector<2x8x1xf32> to vector<2x8x8xf32>
    %143 = arith.mulf %138, %142 : vector<2x8x8xf32>
    %144 = arith.truncf %143 : vector<2x8x8xf32> to vector<2x8x8xbf16>
    "tpu.trace_start"() <{level = 10 : i32, message = "bqk,bkd->bqd"}> : () -> ()
    %cst_46 = arith.constant dense<0.000000e+00> : vector<2x8x8xf32>
    %145 = tpu.matmul %144, %131, %cst_46 {dimension_numbers = #tpu.dot_dimension_numbers<[2], [1], [1], [2], [0, 0, 0, 1, 1, 2], [0], [0]>} : vector<2x8x8xbf16>, vector<2x8x8xbf16>, vector<2x8x8xf32> -> vector<2x8x8xf32>
    "tpu.trace_stop"() : () -> ()
    %146 = vector.shape_cast %145 : vector<2x8x8xf32> to vector<16x8xf32>
    %147 = arith.truncf %146 : vector<16x8xf32> to vector<16x8xbf16>
    %148 = vector.extract_strided_slice %46 {offsets = [24, 0], sizes = [8, 32], strides = [1, 1]} : vector<32x32xbf16> to vector<8x32xbf16>
    %cst_47 = arith.constant dense<0.000000e+00> : vector<16x32xf32>
    %149 = tpu.matmul %147, %148, %cst_47 {dimension_numbers = #tpu.dot_dimension_numbers<[1], [0], [0], [1], [0, 0, 1, 1], [], []>} : vector<16x8xbf16>, vector<8x32xbf16>, vector<16x32xf32> -> vector<16x32xf32>
    %150 = arith.addf %125, %149 : vector<16x32xf32>
    %c0_48 = arith.constant 0 : index
    %c0_49 = arith.constant 0 : index
    %c0_50 = arith.constant 0 : index
    %151 = vector.load %arg9[%c0_48, %c0_49, %c0_50] : memref<1x1x32xf32, #tpu.memory_space<vmem>>, vector<1x1x32xf32>
    %152 = vector.shape_cast %151 : vector<1x1x32xf32> to vector<1x32xf32>
    %c0_51 = arith.constant 0 : index
    %c0_52 = arith.constant 0 : index
    %c0_53 = arith.constant 0 : index
    %153 = vector.load %arg10[%c0_51, %c0_52, %c0_53] : memref<1x1x32xf32, #tpu.memory_space<vmem>>, vector<1x1x32xf32>
    %154 = vector.shape_cast %153 : vector<1x1x32xf32> to vector<1x32xf32>
    %cst_54 = arith.constant dense<0.000000e+00> : vector<16xf32>
    %155 = vector.multi_reduction <add>, %150, %cst_54 [1] : vector<16x32xf32> to vector<16xf32>
    %156 = vector.shape_cast %155 : vector<16xf32> to vector<16x1xf32>
    %cst_55 = arith.constant 3.200000e+01 : f32
    %157 = vector.broadcast %cst_55 : f32 to vector<16x1xf32>
    %158 = arith.divf %156, %157 : vector<16x1xf32>
    %159 = vector.broadcast %158 : vector<16x1xf32> to vector<16x32xf32>
    %160 = arith.subf %150, %159 : vector<16x32xf32>
    %161 = arith.mulf %160, %160 : vector<16x32xf32>
    %cst_56 = arith.constant dense<0.000000e+00> : vector<16xf32>
    %162 = vector.multi_reduction <add>, %161, %cst_56 [1] : vector<16x32xf32> to vector<16xf32>
    %163 = vector.shape_cast %162 : vector<16xf32> to vector<16x1xf32>
    %cst_57 = arith.constant 3.200000e+01 : f32
    %164 = vector.broadcast %cst_57 : f32 to vector<16x1xf32>
    %165 = arith.divf %163, %164 : vector<16x1xf32>
    %166 = vector.broadcast %158 : vector<16x1xf32> to vector<16x32xf32>
    %167 = arith.subf %150, %166 : vector<16x32xf32>
    %cst_58 = arith.constant 9.99999974E-6 : f32
    %168 = vector.broadcast %cst_58 : f32 to vector<16x1xf32>
    %169 = arith.addf %165, %168 : vector<16x1xf32>
    %170 = math.rsqrt %169 : vector<16x1xf32>
    %171 = vector.broadcast %170 : vector<16x1xf32> to vector<16x32xf32>
    %172 = arith.mulf %167, %171 : vector<16x32xf32>
    %173 = vector.broadcast %152 : vector<1x32xf32> to vector<16x32xf32>
    %174 = arith.mulf %172, %173 : vector<16x32xf32>
    %175 = vector.broadcast %154 : vector<1x32xf32> to vector<16x32xf32>
    %176 = arith.addf %174, %175 : vector<16x32xf32>
    %177 = arith.truncf %176 : vector<16x32xf32> to vector<16x32xbf16>
    %c0_59 = arith.constant 0 : index
    %c0_60 = arith.constant 0 : index
    %c0_61 = arith.constant 0 : index
    %178 = vector.load %arg11[%c0_59, %c0_60, %c0_61] : memref<1x32x128xbf16, #tpu.memory_space<vmem>>, vector<1x32x128xbf16>
    %179 = vector.shape_cast %178 : vector<1x32x128xbf16> to vector<32x128xbf16>
    %cst_62 = arith.constant dense<0.000000e+00> : vector<16x128xf32>
    %180 = tpu.matmul %177, %179, %cst_62 {dimension_numbers = #tpu.dot_dimension_numbers<[1], [0], [0], [1], [0, 0, 1, 1], [], []>} : vector<16x32xbf16>, vector<32x128xbf16>, vector<16x128xf32> -> vector<16x128xf32>
    %c0_63 = arith.constant 0 : index
    %c0_64 = arith.constant 0 : index
    %c0_65 = arith.constant 0 : index
    %181 = vector.load %arg12[%c0_63, %c0_64, %c0_65] : memref<1x1x128xf32, #tpu.memory_space<vmem>>, vector<1x1x128xf32>
    %182 = vector.shape_cast %181 : vector<1x1x128xf32> to vector<1x128xf32>
    %183 = vector.broadcast %182 : vector<1x128xf32> to vector<16x128xf32>
    %184 = arith.addf %180, %183 : vector<16x128xf32>
    %cst_66 = arith.constant 1.702000e+00 : f32
    %185 = vector.broadcast %cst_66 : f32 to vector<16x128xf32>
    %186 = arith.mulf %185, %184 : vector<16x128xf32>
    %187 = arith.negf %186 : vector<16x128xf32>
    %188 = math.exp %187 : vector<16x128xf32>
    %cst_67 = arith.constant 1.000000e+00 : f32
    %189 = vector.broadcast %cst_67 : f32 to vector<16x128xf32>
    %190 = arith.addf %189, %188 : vector<16x128xf32>
    %191 = arith.divf %189, %190 : vector<16x128xf32>
    %192 = arith.mulf %184, %191 : vector<16x128xf32>
    %193 = arith.truncf %192 : vector<16x128xf32> to vector<16x128xbf16>
    %c0_68 = arith.constant 0 : index
    %c0_69 = arith.constant 0 : index
    %c0_70 = arith.constant 0 : index
    %194 = vector.load %arg13[%c0_68, %c0_69, %c0_70] : memref<1x128x32xbf16, #tpu.memory_space<vmem>>, vector<1x128x32xbf16>
    %195 = vector.shape_cast %194 : vector<1x128x32xbf16> to vector<128x32xbf16>
    %cst_71 = arith.constant dense<0.000000e+00> : vector<16x32xf32>
    %196 = tpu.matmul %193, %195, %cst_71 {dimension_numbers = #tpu.dot_dimension_numbers<[1], [0], [0], [1], [0, 0, 1, 1], [], []>} : vector<16x128xbf16>, vector<128x32xbf16>, vector<16x32xf32> -> vector<16x32xf32>
    %197 = arith.addf %150, %196 : vector<16x32xf32>
    %c0_72 = arith.constant 0 : index
    %c0_73 = arith.constant 0 : index
    %c0_74 = arith.constant 0 : index
    %198 = vector.load %arg14[%c0_72, %c0_73, %c0_74] : memref<1x1x32xf32, #tpu.memory_space<vmem>>, vector<1x1x32xf32>
    %199 = vector.shape_cast %198 : vector<1x1x32xf32> to vector<1x32xf32>
    %200 = vector.broadcast %199 : vector<1x32xf32> to vector<16x32xf32>
    %201 = arith.addf %197, %200 : vector<16x32xf32>
    %c1_i32 = arith.constant 1 : i32
    %202 = arith.cmpi ne, %arg0, %c1_i32 : i32
    %203 = arith.extui %202 : i1 to i32
    %c0_i32_75 = arith.constant 0 : i32
    %204 = arith.cmpi ne, %203, %c0_i32_75 : i32
    scf.if %204 {
      %c0_78 = arith.constant 0 : index
      %c0_79 = arith.constant 0 : index
      %208 = vector.load %arg17[%c0_78, %c0_79] : memref<16x32xf32, #tpu.memory_space<vmem>>, vector<16x32xf32>
      tpu.vector_store %arg17[%c0_78, %c0_79], %201 {strides = array<i32>} : memref<16x32xf32, #tpu.memory_space<vmem>>, vector<16x32xf32>,
    } else {
    }
    %c1_i32_76 = arith.constant 1 : i32
    %205 = arith.cmpi eq, %arg0, %c1_i32_76 : i32
    %206 = arith.extui %205 : i1 to i32
    %c0_i32_77 = arith.constant 0 : i32
    %207 = arith.cmpi ne, %206, %c0_i32_77 : i32
    scf.if %207 {
      %c0_78 = arith.constant 0 : index
      %c0_79 = arith.constant 0 : index
      %208 = vector.load %arg15[%c0_78, %c0_79] : memref<1x32xf32, #tpu.memory_space<vmem>>, vector<1x32xf32>
      %c0_80 = arith.constant 0 : index
      %c0_81 = arith.constant 0 : index
      %209 = vector.load %arg16[%c0_80, %c0_81] : memref<1x32xf32, #tpu.memory_space<vmem>>, vector<1x32xf32>
      %cst_82 = arith.constant dense<0.000000e+00> : vector<16xf32>
      %210 = vector.multi_reduction <add>, %201, %cst_82 [1] : vector<16x32xf32> to vector<16xf32>
      %211 = vector.shape_cast %210 : vector<16xf32> to vector<16x1xf32>
      %cst_83 = arith.constant 3.200000e+01 : f32
      %212 = vector.broadcast %cst_83 : f32 to vector<16x1xf32>
      %213 = arith.divf %211, %212 : vector<16x1xf32>
      %214 = vector.broadcast %213 : vector<16x1xf32> to vector<16x32xf32>
      %215 = arith.subf %201, %214 : vector<16x32xf32>
      %216 = arith.mulf %215, %215 : vector<16x32xf32>
      %cst_84 = arith.constant dense<0.000000e+00> : vector<16xf32>
      %217 = vector.multi_reduction <add>, %216, %cst_84 [1] : vector<16x32xf32> to vector<16xf32>
      %218 = vector.shape_cast %217 : vector<16xf32> to vector<16x1xf32>
      %cst_85 = arith.constant 3.200000e+01 : f32
      %219 = vector.broadcast %cst_85 : f32 to vector<16x1xf32>
      %220 = arith.divf %218, %219 : vector<16x1xf32>
      %221 = vector.broadcast %213 : vector<16x1xf32> to vector<16x32xf32>
      %222 = arith.subf %201, %221 : vector<16x32xf32>
      %cst_86 = arith.constant 9.99999974E-6 : f32
      %223 = vector.broadcast %cst_86 : f32 to vector<16x1xf32>
      %224 = arith.addf %220, %223 : vector<16x1xf32>
      %225 = math.rsqrt %224 : vector<16x1xf32>
      %226 = vector.broadcast %225 : vector<16x1xf32> to vector<16x32xf32>
      %227 = arith.mulf %222, %226 : vector<16x32xf32>
      %228 = vector.broadcast %208 : vector<1x32xf32> to vector<16x32xf32>
      %229 = arith.mulf %227, %228 : vector<16x32xf32>
      %230 = vector.broadcast %209 : vector<1x32xf32> to vector<16x32xf32>
      %231 = arith.addf %229, %230 : vector<16x32xf32>
      %c0_87 = arith.constant 0 : index
      %c0_88 = arith.constant 0 : index
      %232 = vector.load %arg17[%c0_87, %c0_88] : memref<16x32xf32, #tpu.memory_space<vmem>>, vector<16x32xf32>
      tpu.vector_store %arg17[%c0_87, %c0_88], %231 {strides = array<i32>} : memref<16x32xf32, #tpu.memory_space<vmem>>, vector<16x32xf32>,
    } else {
    }
    return
  }
  func.func @transform_1(%arg0: i32) -> (i32, i32, i32) {
    %c0_i32 = arith.constant 0 : i32
    %c0_i32_0 = arith.constant 0 : i32
    %c0_i32_1 = arith.constant 0 : i32
    %c0_i32_2 = arith.constant 0 : i32
    return %c0_i32, %c0_i32_0, %c0_i32_1 : i32, i32, i32
  }
  func.func @transform_2(%arg0: i32) -> (i32, i32, i32) {
    %c0_i32 = arith.constant 0 : i32
    %c0_i32_0 = arith.constant 0 : i32
    %c0_i32_1 = arith.constant 0 : i32
    return %arg0, %c0_i32, %c0_i32_0 : i32, i32, i32
  }
  func.func @transform_3(%arg0: i32) -> (i32, i32, i32) {
    %c0_i32 = arith.constant 0 : i32
    %c0_i32_0 = arith.constant 0 : i32
    %c0_i32_1 = arith.constant 0 : i32
    return %arg0, %c0_i32, %c0_i32_0 : i32, i32, i32
  }
  func.func @transform_4(%arg0: i32) -> (i32, i32, i32) {
    %c0_i32 = arith.constant 0 : i32
    %c0_i32_0 = arith.constant 0 : i32
    %c0_i32_1 = arith.constant 0 : i32
    return %arg0, %c0_i32, %c0_i32_0 : i32, i32, i32
  }
  func.func @transform_5(%arg0: i32) -> (i32, i32, i32) {
    %c0_i32 = arith.constant 0 : i32
    %c0_i32_0 = arith.constant 0 : i32
    %c0_i32_1 = arith.constant 0 : i32
    return %arg0, %c0_i32, %c0_i32_0 : i32, i32, i32
  }
  func.func @transform_6(%arg0: i32) -> (i32, i32, i32) {
    %c0_i32 = arith.constant 0 : i32
    %c0_i32_0 = arith.constant 0 : i32
    %c0_i32_1 = arith.constant 0 : i32
    return %arg0, %c0_i32, %c0_i32_0 : i32, i32, i32
  }
  func.func @transform_7(%arg0: i32) -> (i32, i32, i32) {
    %c0_i32 = arith.constant 0 : i32
    %c0_i32_0 = arith.constant 0 : i32
    %c0_i32_1 = arith.constant 0 : i32
    return %arg0, %c0_i32, %c0_i32_0 : i32, i32, i32
  }
  func.func @transform_8(%arg0: i32) -> (i32, i32, i32) {
    %c0_i32 = arith.constant 0 : i32
    %c0_i32_0 = arith.constant 0 : i32
    %c0_i32_1 = arith.constant 0 : i32
    return %arg0, %c0_i32, %c0_i32_0 : i32, i32, i32
  }
  func.func @transform_9(%arg0: i32) -> (i32, i32, i32) {
    %c0_i32 = arith.constant 0 : i32
    %c0_i32_0 = arith.constant 0 : i32
    %c0_i32_1 = arith.constant 0 : i32
    return %arg0, %c0_i32, %c0_i32_0 : i32, i32, i32
  }
  func.func @transform_10(%arg0: i32) -> (i32, i32, i32) {
    %c0_i32 = arith.constant 0 : i32
    %c0_i32_0 = arith.constant 0 : i32
    %c0_i32_1 = arith.constant 0 : i32
    return %arg0, %c0_i32, %c0_i32_0 : i32, i32, i32
  }
  func.func @transform_11(%arg0: i32) -> (i32, i32, i32) {
    %c0_i32 = arith.constant 0 : i32
    %c0_i32_0 = arith.constant 0 : i32
    %c0_i32_1 = arith.constant 0 : i32
    return %arg0, %c0_i32, %c0_i32_0 : i32, i32, i32
  }
  func.func @transform_12(%arg0: i32) -> (i32, i32, i32) {
    %c0_i32 = arith.constant 0 : i32
    %c0_i32_0 = arith.constant 0 : i32
    %c0_i32_1 = arith.constant 0 : i32
    return %arg0, %c0_i32, %c0_i32_0 : i32, i32, i32
  }
  func.func @transform_13(%arg0: i32) -> (i32, i32, i32) {
    %c0_i32 = arith.constant 0 : i32
    %c0_i32_0 = arith.constant 0 : i32
    %c0_i32_1 = arith.constant 0 : i32
    return %arg0, %c0_i32, %c0_i32_0 : i32, i32, i32
  }
  func.func @transform_14(%arg0: i32) -> (i32, i32) {
    %c0_i32 = arith.constant 0 : i32
    %c0_i32_0 = arith.constant 0 : i32
    %c0_i32_1 = arith.constant 0 : i32
    return %c0_i32, %c0_i32_0 : i32, i32
  }
  func.func @transform_15(%arg0: i32) -> (i32, i32) {
    %c0_i32 = arith.constant 0 : i32
    %c0_i32_0 = arith.constant 0 : i32
    %c0_i32_1 = arith.constant 0 : i32
    return %c0_i32, %c0_i32_0 : i32, i32
  }
  func.func @transform_16(%arg0: i32) -> (i32, i32) {
    %c0_i32 = arith.constant 0 : i32
    %c0_i32_0 = arith.constant 0 : i32
    %c0_i32_1 = arith.constant 0 : i32
    return %c0_i32, %c0_i32_0 : i32, i32
  }
}

</mosaic_0001>

<llo_original>
// kernel: clip_text_forward.1
$region0: #{clip_text_forward.1}
  #allocation0 [shape = 'u32[]', space=smem, size = 0x4, offset = 0x4, fixed_abs, tag = 'smem constant byte address 0x4 - core index']
  #allocation1 [shape = 'u32[72,128]{1,0:T(1,128)}', space=vmem, size = 0x9000, scoped, tag = 'internal scratch']
  #allocation5 [shape = 's32[]', space=sflag, size = 0x4, offset = 0, fixed_abs, tag = 'sflag constant byte address 0x0 - dummy sync flag']
  %s0 = inlined_call_operand.vmem [shape: f32[16,32], index: 0, kind: input, shape index: {}]
  %s1 = inlined_call_operand.vmem [shape: f32[2,8,8], index: 1, kind: input, shape index: {}]
  %s2 = inlined_call_operand.vmem [shape: f32[2,1,32], index: 2, kind: input, shape index: {}]
  %s3 = inlined_call_operand.vmem [shape: f32[2,1,32], index: 3, kind: input, shape index: {}]
  %s4 = inlined_call_operand.vmem [shape: bf16[2,32,96], index: 4, kind: input, shape index: {}]
  %s5 = inlined_call_operand.vmem [shape: f32[2,1,96], index: 5, kind: input, shape index: {}]
  %s6 = inlined_call_operand.vmem [shape: bf16[2,32,32], index: 6, kind: input, shape index: {}]
  %s7 = inlined_call_operand.vmem [shape: f32[2,1,32], index: 7, kind: input, shape index: {}]
  %s8 = inlined_call_operand.vmem [shape: f32[2,1,32], index: 8, kind: input, shape index: {}]
  %s9 = inlined_call_operand.vmem [shape: f32[2,1,32], index: 9, kind: input, shape index: {}]
  %s10 = inlined_call_operand.vmem [shape: bf16[2,32,128], index: 10, kind: input, shape index: {}]
  %s11 = inlined_call_operand.vmem [shape: f32[2,1,128], index: 11, kind: input, shape index: {}]
  %s12 = inlined_call_operand.vmem [shape: bf16[2,128,32], index: 12, kind: input, shape index: {}]
  %s13 = inlined_call_operand.vmem [shape: f32[2,1,32], index: 13, kind: input, shape index: {}]
  %s14 = inlined_call_operand.vmem [shape: f32[1,32], index: 14, kind: input, shape index: {}]
  %s15 = inlined_call_operand.vmem [shape: f32[1,32], index: 15, kind: input, shape index: {}]
  %s16 = inlined_call_operand.hbm [shape: f32[16,32], index: 16, kind: output, shape index: {}]
  %s17 = sld [smem:[#allocation0]]
  $region125: #{clip_text_forward.1} parent=0
    _
  %s19 = ssub.s32 1, %s17
  %s20 = scalar_select 0, %s19, %s17
  $region1: #{clip_text_forward.1} parent=0
    #allocation2 [shape = 'u8[8192]{0}', space=vmem, size = 0x2000, scoped, tag = 'output window, operand 0, single buffered']
    #allocation3 [shape = 's32[2]{0}', space=sflag, size = 0x8, scoped, tag = 'scoped memory for clip_text_forward.1']
    %21 = vsyncpa [#allocation3], 0
    loop: start=0, step=1, limit=4
    $region2: #{clip_text_forward.1} parent=1 // loop_pre_header
      _
    $region3: #{clip_text_forward.1} parent=1 // loop_header
      %s23 = sphi 0, %s27
      %p24 = scmp.ge.s32.totalorder %s23, 4
      %s31 = sphi 0, %s31
      %s33 = sphi 0, %s31
      %s34 = sphi 0, %s33
      %s48 = sphi 0, %s34
      %s54 = sphi 0, %s56
      %s57 = sphi 0, %s54
      %s58 = sphi 0, %s57
      %s74 = sphi 0, %s58
      %s80 = sphi 0, %s82
      %s83 = sphi 0, %s80
      %s84 = sphi 0, %s83
      %s100 = sphi 0, %s84
      %s106 = sphi 0, %s108
      %s109 = sphi 0, %s106
      %s110 = sphi 0, %s109
      %s126 = sphi 0, %s110
      %s132 = sphi 0, %s134
      %s135 = sphi 0, %s132
      %s136 = sphi 0, %s135
      %s152 = sphi 0, %s136
      %s158 = sphi 0, %s160
      %s161 = sphi 0, %s158
      %s162 = sphi 0, %s161
      %s178 = sphi 0, %s162
      %s184 = sphi 0, %s186
      %s187 = sphi 0, %s184
      %s188 = sphi 0, %s187
      %s204 = sphi 0, %s188
      %s210 = sphi 0, %s212
      %s213 = sphi 0, %s210
      %s214 = sphi 0, %s213
      %s230 = sphi 0, %s214
      %s236 = sphi 0, %s238
      %s239 = sphi 0, %s236
      %s240 = sphi 0, %s239
      %s256 = sphi 0, %s240
      %s262 = sphi 0, %s264
      %s265 = sphi 0, %s262
      %s266 = sphi 0, %s265
      %s282 = sphi 0, %s266
      %s288 = sphi 0, %s290
      %s291 = sphi 0, %s288
      %s292 = sphi 0, %s291
      %s308 = sphi 0, %s292
      %s314 = sphi 0, %s316
      %s317 = sphi 0, %s314
      %s318 = sphi 0, %s317
      %s334 = sphi 0, %s318
      %s340 = sphi 0, %s342
      %s343 = sphi 0, %s340
      %s344 = sphi 0, %s343
      %s360 = sphi 0, %s344
      %s364 = sphi 0, %s364
      %s366 = sphi 0, %s364
      %s367 = sphi 0, %s366
      %s381 = sphi 0, %s367
      %s385 = sphi 0, %s385
      %s387 = sphi 0, %s385
      %s388 = sphi 0, %s387
      %s402 = sphi 0, %s388
      %s406 = sphi 0, %s406
      %s408 = sphi 0, %s406
      %s409 = sphi 0, %s408
      %s423 = sphi 0, %s409
    $region4: #{clip_text_forward.1} parent=1 // loop_header_branch
      %26 = sbr.rel (%p24) target = $region8
    $region5: #{clip_text_forward.1} parent=1 // loop_body
      %s28 = ssub.s32 %s23, 1
      %s29 = ssub.s32 %s23, 2
      %s30 = sadd.s32 %s23, 1
      %s32 = sadd.s32 %s31, 1
      %p35 = scmp.eq.s32.totalorder %s23, 1
      %p36 = scmp.ne.s32.totalorder %s31, %s33
      %p37 = scmp.eq.s32.totalorder %s23, 0
      %p38 = por %p36, %p37
      %p39 = scmp.ne.s32.totalorder %s31, %s33
      %p40 = scmp.eq.s32.totalorder %s28, 1
      %p41 = por %p39, %p40
      %p42 = scmp.ne.s32.totalorder %s33, %s34
      %p43 = scmp.eq.s32.totalorder %s28, 0
      %p44 = por %p42, %p43
      %p45 = scmp.ne.s32.totalorder %s33, %s34
      %p46 = scmp.eq.s32.totalorder %s29, 1
      %p47 = por %p45, %p46
      %p49 = scmp.ne.s32.totalorder %s34, %s48
      %p50 = scmp.eq.s32.totalorder %s29, 0
      %p51 = por %p49, %p50
      %s52 = ssub.s32 %s23, %s30
      %p53 = scmp.eq.s32.totalorder %s52, 0
      %s55 = sadd.s32 %s54, 1
      %s56 = scalar_select %p53, %s54, %s55
      %p59 = pneg %p53
      %p60 = scmp.eq.s32.totalorder %s23, 1
      %p61 = por %p59, %p60
      %p62 = scmp.ne.s32.totalorder %s54, %s57
      %p63 = scmp.eq.s32.totalorder %s23, 0
      %p64 = por %p62, %p63
      %p65 = scmp.ne.s32.totalorder %s54, %s57
      %p66 = scmp.eq.s32.totalorder %s28, 1
      %p67 = por %p65, %p66
      %p68 = scmp.ne.s32.totalorder %s57, %s58
      %p69 = scmp.eq.s32.totalorder %s28, 0
      %p70 = por %p68, %p69
      %p71 = scmp.ne.s32.totalorder %s57, %s58
      %p72 = scmp.eq.s32.totalorder %s29, 1
      %p73 = por %p71, %p72
      %p75 = scmp.ne.s32.totalorder %s58, %s74
      %p76 = scmp.eq.s32.totalorder %s29, 0
      %p77 = por %p75, %p76
      %s78 = ssub.s32 %s23, %s30
      %p79 = scmp.eq.s32.totalorder %s78, 0
      %s81 = sadd.s32 %s80, 1
      %s82 = scalar_select %p79, %s80, %s81
      %p85 = pneg %p79
      %p86 = scmp.eq.s32.totalorder %s23, 1
      %p87 = por %p85, %p86
      %p88 = scmp.ne.s32.totalorder %s80, %s83
      %p89 = scmp.eq.s32.totalorder %s23, 0
      %p90 = por %p88, %p89
      %p91 = scmp.ne.s32.totalorder %s80, %s83
      %p92 = scmp.eq.s32.totalorder %s28, 1
      %p93 = por %p91, %p92
      %p94 = scmp.ne.s32.totalorder %s83, %s84
      %p95 = scmp.eq.s32.totalorder %s28, 0
      %p96 = por %p94, %p95
      %p97 = scmp.ne.s32.totalorder %s83, %s84
      %p98 = scmp.eq.s32.totalorder %s29, 1
      %p99 = por %p97, %p98
      %p101 = scmp.ne.s32.totalorder %s84, %s100
      %p102 = scmp.eq.s32.totalorder %s29, 0
      %p103 = por %p101, %p102
      %s104 = ssub.s32 %s23, %s30
      %p105 = scmp.eq.s32.totalorder %s104, 0
      %s107 = sadd.s32 %s106, 1
      %s108 = scalar_select %p105, %s106, %s107
      %p111 = pneg %p105
      %p112 = scmp.eq.s32.totalorder %s23, 1
      %p113 = por %p111, %p112
      %p114 = scmp.ne.s32.totalorder %s106, %s109
      %p115 = scmp.eq.s32.totalorder %s23, 0
      %p116 = por %p114, %p115
      %p117 = scmp.ne.s32.totalorder %s106, %s109
      %p118 = scmp.eq.s32.totalorder %s28, 1
      %p119 = por %p117, %p118
      %p120 = scmp.ne.s32.totalorder %s109, %s110
      %p121 = scmp.eq.s32.totalorder %s28, 0
      %p122 = por %p120, %p121
      %p123 = scmp.ne.s32.totalorder %s109, %s110
      %p124 = scmp.eq.s32.totalorder %s29, 1
      %p125 = por %p123, %p124
      %p127 = scmp.ne.s32.totalorder %s110, %s126
      %p128 = scmp.eq.s32.totalorder %s29, 0
      %p129 = por %p127, %p128
      %s130 = ssub.s32 %s23, %s30
      %p131 = scmp.eq.s32.totalorder %s130, 0
      %s133 = sadd.s32 %s132, 1
      %s134 = scalar_select %p131, %s132, %s133
      %p137 = pneg %p131
      %p138 = scmp.eq.s32.totalorder %s23, 1
      %p139 = por %p137, %p138
      %p140 = scmp.ne.s32.totalorder %s132, %s135
      %p141 = scmp.eq.s32.totalorder %s23, 0
      %p142 = por %p140, %p141
      %p143 = scmp.ne.s32.totalorder %s132, %s135
      %p144 = scmp.eq.s32.totalorder %s28, 1
      %p145 = por %p143, %p144
      %p146 = scmp.ne.s32.totalorder %s135, %s136
      %p147 = scmp.eq.s32.totalorder %s28, 0
      %p148 = por %p146, %p147
      %p149 = scmp.ne.s32.totalorder %s135, %s136
      %p150 = scmp.eq.s32.totalorder %s29, 1
      %p151 = por %p149, %p150
      %p153 = scmp.ne.s32.totalorder %s136, %s152
      %p154 = scmp.eq.s32.totalorder %s29, 0
      %p155 = por %p153, %p154
      %s156 = ssub.s32 %s23, %s30
      %p157 = scmp.eq.s32.totalorder %s156, 0
      %s159 = sadd.s32 %s158, 1
      %s160 = scalar_select %p157, %s158, %s159
      %p163 = pneg %p157
      %p164 = scmp.eq.s32.totalorder %s23, 1
      %p165 = por %p163, %p164
      %p166 = scmp.ne.s32.totalorder %s158, %s161
      %p167 = scmp.eq.s32.totalorder %s23, 0
      %p168 = por %p166, %p167
      %p169 = scmp.ne.s32.totalorder %s158, %s161
      %p170 = scmp.eq.s32.totalorder %s28, 1
      %p171 = por %p169, %p170
      %p172 = scmp.ne.s32.totalorder %s161, %s162
      %p173 = scmp.eq.s32.totalorder %s28, 0
      %p174 = por %p172, %p173
      %p175 = scmp.ne.s32.totalorder %s161, %s162
      %p176 = scmp.eq.s32.totalorder %s29, 1
      %p177 = por %p175, %p176
      %p179 = scmp.ne.s32.totalorder %s162, %s178
      %p180 = scmp.eq.s32.totalorder %s29, 0
      %p181 = por %p179, %p180
      %s182 = ssub.s32 %s23, %s30
      %p183 = scmp.eq.s32.totalorder %s182, 0
      %s185 = sadd.s32 %s184, 1
      %s186 = scalar_select %p183, %s184, %s185
      %p189 = pneg %p183
      %p190 = scmp.eq.s32.totalorder %s23, 1
      %p191 = por %p189, %p190
      %p192 = scmp.ne.s32.totalorder %s184, %s187
      %p193 = scmp.eq.s32.totalorder %s23, 0
      %p194 = por %p192, %p193
      %p195 = scmp.ne.s32.totalorder %s184, %s187
      %p196 = scmp.eq.s32.totalorder %s28, 1
      %p197 = por %p195, %p196
      %p198 = scmp.ne.s32.totalorder %s187, %s188
      %p199 = scmp.eq.s32.totalorder %s28, 0
      %p200 = por %p198, %p199
      %p201 = scmp.ne.s32.totalorder %s187, %s188
      %p202 = scmp.eq.s32.totalorder %s29, 1
      %p203 = por %p201, %p202
      %p205 = scmp.ne.s32.totalorder %s188, %s204
      %p206 = scmp.eq.s32.totalorder %s29, 0
      %p207 = por %p205, %p206
      %s208 = ssub.s32 %s23, %s30
      %p209 = scmp.eq.s32.totalorder %s208, 0
      %s211 = sadd.s32 %s210, 1
      %s212 = scalar_select %p209, %s210, %s211
      %p215 = pneg %p209
      %p216 = scmp.eq.s32.totalorder %s23, 1
      %p217 = por %p215, %p216
      %p218 = scmp.ne.s32.totalorder %s210, %s213
      %p219 = scmp.eq.s32.totalorder %s23, 0
      %p220 = por %p218, %p219
      %p221 = scmp.ne.s32.totalorder %s210, %s213
      %p222 = scmp.eq.s32.totalorder %s28, 1
      %p223 = por %p221, %p222
      %p224 = scmp.ne.s32.totalorder %s213, %s214
      %p225 = scmp.eq.s32.totalorder %s28, 0
      %p226 = por %p224, %p225
      %p227 = scmp.ne.s32.totalorder %s213, %s214
      %p228 = scmp.eq.s32.totalorder %s29, 1
      %p229 = por %p227, %p228
      %p231 = scmp.ne.s32.totalorder %s214, %s230
      %p232 = scmp.eq.s32.totalorder %s29, 0
      %p233 = por %p231, %p232
      %s234 = ssub.s32 %s23, %s30
      %p235 = scmp.eq.s32.totalorder %s234, 0
      %s237 = sadd.s32 %s236, 1
      %s238 = scalar_select %p235, %s236, %s237
      %p241 = pneg %p235
      %p242 = scmp.eq.s32.totalorder %s23, 1
      %p243 = por %p241, %p242
      %p244 = scmp.ne.s32.totalorder %s236, %s239
      %p245 = scmp.eq.s32.totalorder %s23, 0
      %p246 = por %p244, %p245
      %p247 = scmp.ne.s32.totalorder %s236, %s239
      %p248 = scmp.eq.s32.totalorder %s28, 1
      %p249 = por %p247, %p248
      %p250 = scmp.ne.s32.totalorder %s239, %s240
      %p251 = scmp.eq.s32.totalorder %s28, 0
      %p252 = por %p250, %p251
      %p253 = scmp.ne.s32.totalorder %s239, %s240
      %p254 = scmp.eq.s32.totalorder %s29, 1
      %p255 = por %p253, %p254
      %p257 = scmp.ne.s32.totalorder %s240, %s256
      %p258 = scmp.eq.s32.totalorder %s29, 0
      %p259 = por %p257, %p258
      %s260 = ssub.s32 %s23, %s30
      %p261 = scmp.eq.s32.totalorder %s260, 0
      %s263 = sadd.s32 %s262, 1
      %s264 = scalar_select %p261, %s262, %s263
      %p267 = pneg %p261
      %p268 = scmp.eq.s32.totalorder %s23, 1
      %p269 = por %p267, %p268
      %p270 = scmp.ne.s32.totalorder %s262, %s265
      %p271 = scmp.eq.s32.totalorder %s23, 0
      %p272 = por %p270, %p271
      %p273 = scmp.ne.s32.totalorder %s262, %s265
      %p274 = scmp.eq.s32.totalorder %s28, 1
      %p275 = por %p273, %p274
      %p276 = scmp.ne.s32.totalorder %s265, %s266
      %p277 = scmp.eq.s32.totalorder %s28, 0
      %p278 = por %p276, %p277
      %p279 = scmp.ne.s32.totalorder %s265, %s266
      %p280 = scmp.eq.s32.totalorder %s29, 1
      %p281 = por %p279, %p280
      %p283 = scmp.ne.s32.totalorder %s266, %s282
      %p284 = scmp.eq.s32.totalorder %s29, 0
      %p285 = por %p283, %p284
      %s286 = ssub.s32 %s23, %s30
      %p287 = scmp.eq.s32.totalorder %s286, 0
      %s289 = sadd.s32 %s288, 1
      %s290 = scalar_select %p287, %s288, %s289
      %p293 = pneg %p287
      %p294 = scmp.eq.s32.totalorder %s23, 1
      %p295 = por %p293, %p294
      %p296 = scmp.ne.s32.totalorder %s288, %s291
      %p297 = scmp.eq.s32.totalorder %s23, 0
      %p298 = por %p296, %p297
      %p299 = scmp.ne.s32.totalorder %s288, %s291
      %p300 = scmp.eq.s32.totalorder %s28, 1
      %p301 = por %p299, %p300
      %p302 = scmp.ne.s32.totalorder %s291, %s292
      %p303 = scmp.eq.s32.totalorder %s28, 0
      %p304 = por %p302, %p303
      %p305 = scmp.ne.s32.totalorder %s291, %s292
      %p306 = scmp.eq.s32.totalorder %s29, 1
      %p307 = por %p305, %p306
      %p309 = scmp.ne.s32.totalorder %s292, %s308
      %p310 = scmp.eq.s32.totalorder %s29, 0
      %p311 = por %p309, %p310
      %s312 = ssub.s32 %s23, %s30
      %p313 = scmp.eq.s32.totalorder %s312, 0
      %s315 = sadd.s32 %s314, 1
      %s316 = scalar_select %p313, %s314, %s315
      %p319 = pneg %p313
      %p320 = scmp.eq.s32.totalorder %s23, 1
      %p321 = por %p319, %p320
      %p322 = scmp.ne.s32.totalorder %s314, %s317
      %p323 = scmp.eq.s32.totalorder %s23, 0
      %p324 = por %p322, %p323
      %p325 = scmp.ne.s32.totalorder %s314, %s317
      %p326 = scmp.eq.s32.totalorder %s28, 1
      %p327 = por %p325, %p326
      %p328 = scmp.ne.s32.totalorder %s317, %s318
      %p329 = scmp.eq.s32.totalorder %s28, 0
      %p330 = por %p328, %p329
      %p331 = scmp.ne.s32.totalorder %s317, %s318
      %p332 = scmp.eq.s32.totalorder %s29, 1
      %p333 = por %p331, %p332
      %p335 = scmp.ne.s32.totalorder %s318, %s334
      %p336 = scmp.eq.s32.totalorder %s29, 0
      %p337 = por %p335, %p336
      %s338 = ssub.s32 %s23, %s30
      %p339 = scmp.eq.s32.totalorder %s338, 0
      %s341 = sadd.s32 %s340, 1
      %s342 = scalar_select %p339, %s340, %s341
      %p345 = pneg %p339
      %p346 = scmp.eq.s32.totalorder %s23, 1
      %p347 = por %p345, %p346
      %p348 = scmp.ne.s32.totalorder %s340, %s343
      %p349 = scmp.eq.s32.totalorder %s23, 0
      %p350 = por %p348, %p349
      %p351 = scmp.ne.s32.totalorder %s340, %s343
      %p352 = scmp.eq.s32.totalorder %s28, 1
      %p353 = por %p351, %p352
      %p354 = scmp.ne.s32.totalorder %s343, %s344
      %p355 = scmp.eq.s32.totalorder %s28, 0
      %p356 = por %p354, %p355
      %p357 = scmp.ne.s32.totalorder %s343, %s344
      %p358 = scmp.eq.s32.totalorder %s29, 1
      %p359 = por %p357, %p358
      %p361 = scmp.ne.s32.totalorder %s344, %s360
      %p362 = scmp.eq.s32.totalorder %s29, 0
      %p363 = por %p361, %p362
      %s365 = sadd.s32 %s364, 1
      %p368 = scmp.eq.s32.totalorder %s23, 1
      %p369 = scmp.ne.s32.totalorder %s364, %s366
      %p370 = scmp.eq.s32.totalorder %s23, 0
      %p371 = por %p369, %p370
      %p372 = scmp.ne.s32.totalorder %s364, %s366
      %p373 = scmp.eq.s32.totalorder %s28, 1
      %p374 = por %p372, %p373
      %p375 = scmp.ne.s32.totalorder %s366, %s367
      %p376 = scmp.eq.s32.totalorder %s28, 0
      %p377 = por %p375, %p376
      %p378 = scmp.ne.s32.totalorder %s366, %s367
      %p379 = scmp.eq.s32.totalorder %s29, 1
      %p380 = por %p378, %p379
      %p382 = scmp.ne.s32.totalorder %s367, %s381
      %p383 = scmp.eq.s32.totalorder %s29, 0
      %p384 = por %p382, %p383
      %s386 = sadd.s32 %s385, 1
      %p389 = scmp.eq.s32.totalorder %s23, 1
      %p390 = scmp.ne.s32.totalorder %s385, %s387
      %p391 = scmp.eq.s32.totalorder %s23, 0
      %p392 = por %p390, %p391
      %p393 = scmp.ne.s32.totalorder %s385, %s387
      %p394 = scmp.eq.s32.totalorder %s28, 1
      %p395 = por %p393, %p394
      %p396 = scmp.ne.s32.totalorder %s387, %s388
      %p397 = scmp.eq.s32.totalorder %s28, 0
      %p398 = por %p396, %p397
      %p399 = scmp.ne.s32.totalorder %s387, %s388
      %p400 = scmp.eq.s32.totalorder %s29, 1
      %p401 = por %p399, %p400
      %p403 = scmp.ne.s32.totalorder %s388, %s402
      %p404 = scmp.eq.s32.totalorder %s29, 0
      %p405 = por %p403, %p404
      %s407 = sadd.s32 %s406, 1
      %p410 = scmp.eq.s32.totalorder %s23, 1
      %p411 = scmp.ne.s32.totalorder %s406, %s408
      %p412 = scmp.eq.s32.totalorder %s23, 0
      %p413 = por %p411, %p412
      %p414 = scmp.ne.s32.totalorder %s406, %s408
      %p415 = scmp.eq.s32.totalorder %s28, 1
      %p416 = por %p414, %p415
      %p417 = scmp.ne.s32.totalorder %s408, %s409
      %p418 = scmp.eq.s32.totalorder %s28, 0
      %p419 = por %p417, %p418
      %p420 = scmp.ne.s32.totalorder %s408, %s409
      %p421 = scmp.eq.s32.totalorder %s29, 1
      %p422 = por %p420, %p421
      %p424 = scmp.ne.s32.totalorder %s409, %s423
      %p425 = scmp.eq.s32.totalorder %s29, 0
      %p426 = por %p424, %p425
      %p427 = scmp.le.s32.totalorder 1, %s23
      %p428 = scmp.lt.s32.totalorder %s23, 3
      %p429 = pnand %p427, %p428
      %p430 = pneg %p429
      // Predicated region
      $region9: #{clip_text_forward.1} parent=5 // pred_check
        _
      $region10: #{clip_text_forward.1} parent=5 // pred_check_branch
        %432 = sbr.rel (%p429) target = $region12
      $region11: #{clip_text_forward.1} parent=5 // pred_region
        %s433 = ssub.s32 %s23, 1
        // Predicated region
        $region13: #{clip_text_forward.1} parent=11 // pred_check
          %p434 = pneg %p44
        $region14: #{clip_text_forward.1} parent=11 // pred_check_branch
          %436 = sbr.rel (%p434) target = $region16
        $region15: #{clip_text_forward.1} parent=11 // pred_region
          _
        $region16: #{clip_text_forward.1} parent=11 // pred_fallthru
          _
        // Predicated region
        $region17: #{clip_text_forward.1} parent=11 // pred_check
          %p437 = pneg %p377
        $region18: #{clip_text_forward.1} parent=11 // pred_check_branch
          %439 = sbr.rel (%p437) target = $region20
        $region19: #{clip_text_forward.1} parent=11 // pred_region
          _
        $region20: #{clip_text_forward.1} parent=11 // pred_fallthru
          _
        // Predicated region
        $region21: #{clip_text_forward.1} parent=11 // pred_check
          %p440 = pneg %p398
        $region22: #{clip_text_forward.1} parent=11 // pred_check_branch
          %442 = sbr.rel (%p440) target = $region24
        $region23: #{clip_text_forward.1} parent=11 // pred_region
          _
        $region24: #{clip_text_forward.1} parent=11 // pred_fallthru
          _
      $region12: #{clip_text_forward.1} parent=5 // pred_fallthru
        _
      %p443 = scmp.lt.s32.totalorder %s23, 2
      // Predicated region
      $region25: #{clip_text_forward.1} parent=5 // pred_check
        %p444 = pneg %p443
      $region26: #{clip_text_forward.1} parent=5 // pred_check_branch
        %446 = sbr.rel (%p444) target = $region28
      $region27: #{clip_text_forward.1} parent=5 // pred_region
        // Predicated region
        $region29: #{clip_text_forward.1} parent=27 // pred_check
          %p447 = pneg %p64
        $region30: #{clip_text_forward.1} parent=27 // pred_check_branch
          %449 = sbr.rel (%p447) target = $region32
        $region31: #{clip_text_forward.1} parent=27 // pred_region
          %p450 = scmp.lt.s32.totalorder %s23, 1
          %s451 = scalar_select %p450, %s23, 1
          %s452 = scalar_lea.vmem %s2, %s451
        $region32: #{clip_text_forward.1} parent=27 // pred_fallthru
          _
        // Predicated region
        $region33: #{clip_text_forward.1} parent=27 // pred_check
          %p453 = pneg %p90
        $region34: #{clip_text_forward.1} parent=27 // pred_check_branch
          %455 = sbr.rel (%p453) target = $region36
        $region35: #{clip_text_forward.1} parent=27 // pred_region
          %p456 = scmp.lt.s32.totalorder %s23, 1
          %s457 = scalar_select %p456, %s23, 1
          %s458 = scalar_lea.vmem %s3, %s457
        $region36: #{clip_text_forward.1} parent=27 // pred_fallthru
          _
        // Predicated region
        $region37: #{clip_text_forward.1} parent=27 // pred_check
          %p459 = pneg %p116
        $region38: #{clip_text_forward.1} parent=27 // pred_check_branch
          %461 = sbr.rel (%p459) target = $region40
        $region39: #{clip_text_forward.1} parent=27 // pred_region
          %p462 = scmp.lt.s32.totalorder %s23, 1
          %s463 = scalar_select %p462, %s23, 1
          %s464 = smul.addr %s463, 4
          %s465 = smul.addr %s464, 4
          %s466 = scalar_lea.vmem %s4, %s465
        $region40: #{clip_text_forward.1} parent=27 // pred_fallthru
          _
        // Predicated region
        $region41: #{clip_text_forward.1} parent=27 // pred_check
          %p467 = pneg %p142
        $region42: #{clip_text_forward.1} parent=27 // pred_check_branch
          %469 = sbr.rel (%p467) target = $region44
        $region43: #{clip_text_forward.1} parent=27 // pred_region
          %p470 = scmp.lt.s32.totalorder %s23, 1
          %s471 = scalar_select %p470, %s23, 1
          %s472 = scalar_lea.vmem %s5, %s471
        $region44: #{clip_text_forward.1} parent=27 // pred_fallthru
          _
        // Predicated region
        $region45: #{clip_text_forward.1} parent=27 // pred_check
          %p473 = pneg %p168
        $region46: #{clip_text_forward.1} parent=27 // pred_check_branch
          %475 = sbr.rel (%p473) target = $region48
        $region47: #{clip_text_forward.1} parent=27 // pred_region
          %p476 = scmp.lt.s32.totalorder %s23, 1
          %s477 = scalar_select %p476, %s23, 1
          %s478 = smul.addr %s477, 4
          %s479 = smul.addr %s478, 4
          %s480 = scalar_lea.vmem %s6, %s479
        $region48: #{clip_text_forward.1} parent=27 // pred_fallthru
          _
        // Predicated region
        $region49: #{clip_text_forward.1} parent=27 // pred_check
          %p481 = pneg %p194
        $region50: #{clip_text_forward.1} parent=27 // pred_check_branch
          %483 = sbr.rel (%p481) target = $region52
        $region51: #{clip_text_forward.1} parent=27 // pred_region
          %p484 = scmp.lt.s32.totalorder %s23, 1
          %s485 = scalar_select %p484, %s23, 1
          %s486 = scalar_lea.vmem %s7, %s485
        $region52: #{clip_text_forward.1} parent=27 // pred_fallthru
          _
        // Predicated region
        $region53: #{clip_text_forward.1} parent=27 // pred_check
          %p487 = pneg %p220
        $region54: #{clip_text_forward.1} parent=27 // pred_check_branch
          %489 = sbr.rel (%p487) target = $region56
        $region55: #{clip_text_forward.1} parent=27 // pred_region
          %p490 = scmp.lt.s32.totalorder %s23, 1
          %s491 = scalar_select %p490, %s23, 1
          %s492 = scalar_lea.vmem %s8, %s491
        $region56: #{clip_text_forward.1} parent=27 // pred_fallthru
          _
        // Predicated region
        $region57: #{clip_text_forward.1} parent=27 // pred_check
          %p493 = pneg %p246
        $region58: #{clip_text_forward.1} parent=27 // pred_check_branch
          %495 = sbr.rel (%p493) target = $region60
        $region59: #{clip_text_forward.1} parent=27 // pred_region
          %p496 = scmp.lt.s32.totalorder %s23, 1
          %s497 = scalar_select %p496, %s23, 1
          %s498 = scalar_lea.vmem %s9, %s497
        $region60: #{clip_text_forward.1} parent=27 // pred_fallthru
          _
        // Predicated region
        $region61: #{clip_text_forward.1} parent=27 // pred_check
          %p499 = pneg %p272
        $region62: #{clip_text_forward.1} parent=27 // pred_check_branch
          %501 = sbr.rel (%p499) target = $region64
        $region63: #{clip_text_forward.1} parent=27 // pred_region
          %p502 = scmp.lt.s32.totalorder %s23, 1
          %s503 = scalar_select %p502, %s23, 1
          %s504 = smul.addr %s503, 4
          %s505 = smul.addr %s504, 4
          %s506 = scalar_lea.vmem %s10, %s505
        $region64: #{clip_text_forward.1} parent=27 // pred_fallthru
          _
        // Predicated region
        $region65: #{clip_text_forward.1} parent=27 // pred_check
          %p507 = pneg %p298
        $region66: #{clip_text_forward.1} parent=27 // pred_check_branch
          %509 = sbr.rel (%p507) target = $region68
        $region67: #{clip_text_forward.1} parent=27 // pred_region
          %p510 = scmp.lt.s32.totalorder %s23, 1
          %s511 = scalar_select %p510, %s23, 1
          %s512 = scalar_lea.vmem %s11, %s511
        $region68: #{clip_text_forward.1} parent=27 // pred_fallthru
          _
        // Predicated region
        $region69: #{clip_text_forward.1} parent=27 // pred_check
          %p513 = pneg %p324
        $region70: #{clip_text_forward.1} parent=27 // pred_check_branch
          %515 = sbr.rel (%p513) target = $region72
        $region71: #{clip_text_forward.1} parent=27 // pred_region
          %p516 = scmp.lt.s32.totalorder %s23, 1
          %s517 = scalar_select %p516, %s23, 1
          %s518 = smul.addr %s517, 16
          %s519 = smul.addr %s518, 4
          %s520 = scalar_lea.vmem %s12, %s519
        $region72: #{clip_text_forward.1} parent=27 // pred_fallthru
          _
        // Predicated region
        $region73: #{clip_text_forward.1} parent=27 // pred_check
          %p521 = pneg %p350
        $region74: #{clip_text_forward.1} parent=27 // pred_check_branch
          %523 = sbr.rel (%p521) target = $region76
        $region75: #{clip_text_forward.1} parent=27 // pred_region
          %p524 = scmp.lt.s32.totalorder %s23, 1
          %s525 = scalar_select %p524, %s23, 1
          %s526 = scalar_lea.vmem %s13, %s525
        $region76: #{clip_text_forward.1} parent=27 // pred_fallthru
          _
      $region28: #{clip_text_forward.1} parent=5 // pred_fallthru
        _
      %p527 = scmp.le.s32.totalorder 1, %s23
      %p528 = scmp.lt.s32.totalorder %s23, 3
      %p529 = pnand %p527, %p528
      %p530 = pneg %p529
      // Predicated region
      $region77: #{clip_text_forward.1} parent=5 // pred_check
        _
      $region78: #{clip_text_forward.1} parent=5 // pred_check_branch
        %532 = sbr.rel (%p529) target = $region80
      $region79: #{clip_text_forward.1} parent=5 // pred_region
        %s533 = ssub.s32 %s23, 1
        %p534 = pneg %p44
        %p535 = pneg %p41
        %p536 = scmp.lt.s32.totalorder %s28, 1
        %s537 = scalar_select %p536, %s28, 1
        %s538 = scalar_lea.vmem %s2, %s537
        %p539 = pneg %p70
        %p540 = pneg %p67
        %p541 = scmp.lt.s32.totalorder %s28, 1
        %s542 = scalar_select %p541, %s28, 1
        %s543 = scalar_lea.vmem %s3, %s542
        %p544 = pneg %p96
        %p545 = pneg %p93
        %p546 = scmp.lt.s32.totalorder %s28, 1
        %s547 = scalar_select %p546, %s28, 1
        %s548 = smul.addr %s547, 4
        %s549 = smul.addr %s548, 4
        %s550 = scalar_lea.vmem %s4, %s549
        %p551 = pneg %p122
        %p552 = pneg %p119
        %p553 = scmp.lt.s32.totalorder %s28, 1
        %s554 = scalar_select %p553, %s28, 1
        %s555 = scalar_lea.vmem %s5, %s554
        %p556 = pneg %p148
        %p557 = pneg %p145
        %p558 = scmp.lt.s32.totalorder %s28, 1
        %s559 = scalar_select %p558, %s28, 1
        %s560 = smul.addr %s559, 4
        %s561 = smul.addr %s560, 4
        %s562 = scalar_lea.vmem %s6, %s561
        %p563 = pneg %p174
        %p564 = pneg %p171
        %p565 = scmp.lt.s32.totalorder %s28, 1
        %s566 = scalar_select %p565, %s28, 1
        %s567 = scalar_lea.vmem %s7, %s566
        %p568 = pneg %p200
        %p569 = pneg %p197
        %p570 = scmp.lt.s32.totalorder %s28, 1
        %s571 = scalar_select %p570, %s28, 1
        %s572 = scalar_lea.vmem %s8, %s571
        %p573 = pneg %p226
        %p574 = pneg %p223
        %p575 = scmp.lt.s32.totalorder %s28, 1
        %s576 = scalar_select %p575, %s28, 1
        %s577 = scalar_lea.vmem %s9, %s576
        %p578 = pneg %p252
        %p579 = pneg %p249
        %p580 = scmp.lt.s32.totalorder %s28, 1
        %s581 = scalar_select %p580, %s28, 1
        %s582 = smul.addr %s581, 4
        %s583 = smul.addr %s582, 4
        %s584 = scalar_lea.vmem %s10, %s583
        %p585 = pneg %p278
        %p586 = pneg %p275
        %p587 = scmp.lt.s32.totalorder %s28, 1
        %s588 = scalar_select %p587, %s28, 1
        %s589 = scalar_lea.vmem %s11, %s588
        %p590 = pneg %p304
        %p591 = pneg %p301
        %p592 = scmp.lt.s32.totalorder %s28, 1
        %s593 = scalar_select %p592, %s28, 1
        %s594 = smul.addr %s593, 16
        %s595 = smul.addr %s594, 4
        %s596 = scalar_lea.vmem %s12, %s595
        %p597 = pneg %p330
        %p598 = pneg %p327
        %p599 = scmp.lt.s32.totalorder %s28, 1
        %s600 = scalar_select %p599, %s28, 1
        %s601 = scalar_lea.vmem %s13, %s600
        %p602 = pneg %p356
        %p603 = pneg %p353
        %p604 = pneg %p377
        %p605 = pneg %p374
        %p606 = pneg %p398
        %p607 = pneg %p395
        %p608 = pneg %p419
        %p609 = pneg %p416
        %p610 = scmp.lt.s32.totalorder %s28, 1
        %s611 = scalar_select %p610, %s28, 1
        %s612 = scalar_lea.vmem %s2, %s611
        %p613 = scmp.lt.s32.totalorder %s28, 1
        %s614 = scalar_select %p613, %s28, 1
        %s615 = scalar_lea.vmem %s3, %s614
        %p616 = scmp.lt.s32.totalorder %s28, 1
        %s617 = scalar_select %p616, %s28, 1
        %s618 = smul.addr %s617, 4
        %s619 = smul.addr %s618, 4
        %s620 = scalar_lea.vmem %s4, %s619
        %p621 = scmp.lt.s32.totalorder %s28, 1
        %s622 = scalar_select %p621, %s28, 1
        %s623 = scalar_lea.vmem %s5, %s622
        %p624 = scmp.lt.s32.totalorder %s28, 1
        %s625 = scalar_select %p624, %s28, 1
        %s626 = smul.addr %s625, 4
        %s627 = smul.addr %s626, 4
        %s628 = scalar_lea.vmem %s6, %s627
        %p629 = scmp.lt.s32.totalorder %s28, 1
        %s630 = scalar_select %p629, %s28, 1
        %s631 = scalar_lea.vmem %s7, %s630
        %p632 = scmp.lt.s32.totalorder %s28, 1
        %s633 = scalar_select %p632, %s28, 1
        %s634 = scalar_lea.vmem %s8, %s633
        %p635 = scmp.lt.s32.totalorder %s28, 1
        %s636 = scalar_select %p635, %s28, 1
        %s637 = scalar_lea.vmem %s9, %s636
        %p638 = scmp.lt.s32.totalorder %s28, 1
        %s639 = scalar_select %p638, %s28, 1
        %s640 = smul.addr %s639, 4
        %s641 = smul.addr %s640, 4
        %s642 = scalar_lea.vmem %s10, %s641
        %p643 = scmp.lt.s32.totalorder %s28, 1
        %s644 = scalar_select %p643, %s28, 1
        %s645 = scalar_lea.vmem %s11, %s644
        %p646 = scmp.lt.s32.totalorder %s28, 1
        %s647 = scalar_select %p646, %s28, 1
        %s648 = smul.addr %s647, 16
        %s649 = smul.addr %s648, 4
        %s650 = scalar_lea.vmem %s12, %s649
        %p651 = scmp.lt.s32.totalorder %s28, 1
        %s652 = scalar_select %p651, %s28, 1
        %s653 = scalar_lea.vmem %s13, %s652
        %p655 = scmp.eq.s32.totalorder %s28, 0
        // Predicated region
        $region81: #{clip_text_forward.1} parent=79 // pred_check
          %p656 = pneg %p655
        $region82: #{clip_text_forward.1} parent=79 // pred_check_branch
          %658 = sbr.rel (%p656) target = $region84
        $region83: #{clip_text_forward.1} parent=79 // pred_region
          $region85: #{clip_text_forward.1} parent=83
            #allocation4 [shape = 's32[1]{0}', space=sflag, size = 0x4, scoped, tag = 'scoped memory for clip_text_forward.1']
            // Predicated region
            $region86: #{clip_text_forward.1} parent=85 // pred_check
              _
            $region87: #{clip_text_forward.1} parent=85 // pred_check_branch
              %660 = sbr.rel (0) target = $region89
            $region88: #{clip_text_forward.1} parent=85 // pred_region
              loop: start=0, step=1, limit=1
              $region90: #{clip_text_forward.1} parent=88 // loop_pre_header
                _
              $region91: #{clip_text_forward.1} parent=88 // loop_header
                %s662 = sphi 0, %s666
                %p663 = scmp.ge.s32.totalorder %s662, 1
                %s667 = sphi %s0, %s0
                %s668 = sphi [#allocation2], [#allocation2]
              $region92: #{clip_text_forward.1} parent=88 // loop_header_branch
                %665 = sbr.rel (%p663) target = $region96
              $region93: #{clip_text_forward.1} parent=88 // loop_body
                %v669 = vld [vmem:[%s667] sm:$0xff]
                %670 = vst [vmem:[%s668] sm:$0xff] %v669
                %v671 = vld [vmem:[%s667 + $0x8] sm:$0xff]
                %672 = vst [vmem:[%s668 + $0x8] sm:$0xff] %v671
              $region94: #{clip_text_forward.1} parent=88 // loop_footer
                %s666 = sadd.s32 1, %s662
              $region95: #{clip_text_forward.1} parent=88 // loop_footer_branch
                %661 = sbr.rel target = $region91
              $region96: #{clip_text_forward.1} parent=88 // loop_exit
                _
            $region89: #{clip_text_forward.1} parent=85 // pred_fallthru
              _
            // Predicated region
            $region97: #{clip_text_forward.1} parent=85 // pred_check
              _
            $region98: #{clip_text_forward.1} parent=85 // pred_check_branch
              %674 = sbr.rel target = $region100
            $region99: #{clip_text_forward.1} parent=85 // pred_region
              _
            $region100: #{clip_text_forward.1} parent=85 // pred_fallthru
              _
            // Predicated region
            $region101: #{clip_text_forward.1} parent=85 // pred_check
              _
            $region102: #{clip_text_forward.1} parent=85 // pred_check_branch
              %677 = sbr.rel (0) target = $region104
            $region103: #{clip_text_forward.1} parent=85 // pred_region
              %678 = vsyncadd [#allocation4], 256
            $region104: #{clip_text_forward.1} parent=85 // pred_fallthru
              _
            %s679 = smul.u32 16, 1
            %s680 = sshll.u32 %s679, 4
            %681 = dma.done [#allocation4], %s680
        $region84: #{clip_text_forward.1} parent=79 // pred_fallthru
          _
        %v682 = vld [vmem:[#allocation2] sm:$0xff]
        %v683 = vld [vmem:[#allocation2 + $0x8] sm:$0xff]
        %v684 = vld [vmem:[%s612] sm:$0x1]
        %v685 = vld [vmem:[%s615] sm:$0x1]
        %vm686 = vcmask 261120
        %v687 = vsel %vm686, %v682, 0.0
        %688 = vadd.xlane.f32.xlu0 %v687
        %v689 = vpop.xlane.xlu0 %688
        %v690 = vsel %vm686, %v683, 0.0
        %691 = vadd.xlane.f32.xlu0 %v690
        %v692 = vpop.xlane.xlu0 %691
        %v693 = vrcp.pop 32.0
        %v694 = vmul.f32 32.0, %v693
        %v695 = vsub.f32 1.0, %v694
        %v696 = vmul.f32 %v693, %v695
        %v697 = vadd.f32 %v693, %v696
        %vm698 = vweird.f32 %v693
        %v699 = vsel %vm698, %v693, %v697
        %v700 = vmul.f32 %v689, %v699
        %v701 = vmul.f32 %v692, %v699
        %v702 = vsub.f32 %v682, %v700
        %v703 = vsub.f32 %v683, %v701
        %v704 = vmul.f32 %v702, %v702
        %v705 = vmul.f32 %v703, %v703
        %v706 = vsel %vm686, %v704, 0.0
        %707 = vadd.xlane.f32.xlu0 %v706
        %v708 = vpop.xlane.xlu0 %707
        %v709 = vsel %vm686, %v705, 0.0
        %710 = vadd.xlane.f32.xlu0 %v709
        %v711 = vpop.xlane.xlu0 %710
        %v712 = vmul.f32 %v708, %v699
        %v713 = vmul.f32 %v711, %v699
        %v714 = vadd.f32 %v712, 1e-05
        %v715 = vadd.f32 %v713, 1e-05
        %v716 = vrsqrt.pop %v714
        %v717 = vmul.f32 %v716, %v714
        %v718 = vmul.f32 %v717, %v716
        %v719 = vmul.f32 0.5, %v718
        %v720 = vsub.f32 1.5, %v719
        %v721 = vmul.f32 %v716, %v720
        %vm722 = vweird.f32 %v714
        %vm723 = vweird.f32 %v716
        %vm724 = vmor %vm722, %vm723
        %v725 = vsel %vm724, %v716, %v721
        %v726 = vrsqrt.pop %v715
        %v727 = vmul.f32 %v726, %v715
        %v728 = vmul.f32 %v727, %v726
        %v729 = vmul.f32 0.5, %v728
        %v730 = vsub.f32 1.5, %v729
        %v731 = vmul.f32 %v726, %v730
        %vm732 = vweird.f32 %v715
        %vm733 = vweird.f32 %v726
        %vm734 = vmor %vm732, %vm733
        %v735 = vsel %vm734, %v726, %v731
        %v736 = vmul.f32 %v702, %v725
        %v737 = vmul.f32 %v703, %v735
        %v739 = vperm.slane %v684, 0
        %v741 = vmul.f32 %v736, %v739
        %v742 = vmul.f32 %v737, %v739
        %v744 = vperm.slane %v685, 0
        %v746 = vadd.f32 %v741, %v744
        %v747 = vadd.f32 %v742, %v744
        %v748 = vpack.c.bf16 %v747, %v746
        %v749 = vld [vmem:[%s620] sm:$0xf]
        %v750 = vld [vmem:[%s620 + $0x4] sm:$0xf]
        %v751 = vld [vmem:[%s620 + $0x8] sm:$0xf]
        %v752 = vld [vmem:[%s620 + $0xc] sm:$0xf]
        %v753 = vld [vmem:[%s623] sm:$0x1]
        %v755 = vperm.slane %v753, 0
        %v761 = vunpack.c.l.b16 %v749
        %v762 = vunpack.c.l.b16 %v750
        %v763 = vunpack.c.l.b16 %v751
        %v764 = vunpack.c.l.b16 %v752
        %v765 = vpack.c.b16 %v762, %v761
        %v766 = vpack.c.b16 %v764, %v763
        %v770 = vsel %vm686, %v748, 0
        %772 = vmatpush.bf16.msra.mxu0 0
        %773 = vmatpush.bf16.msra.mxu0 0
        %774 = vmatpush.bf16.msra.mxu0 0
        %775 = vmatpush.bf16.msra.mxu0 0
        %776 = vmatpush.bf16.msra.mxu0 0
        %777 = vmatpush.bf16.msra.mxu0 0
        %778 = vmatpush.bf16.msra.mxu0 %v766
        %779 = vmatpush.bf16.msra.mxu0 %v765
        %780 = vmatmul.bf16.gmra.mxu0 %v770
        %v781 = vpop.f32.mrf.mxu0
        %v782 = vadd.f32 %v755, %v781
        %v783 = vpop.f32.mrf.mxu0
        %v784 = vadd.f32 %v755, %v783
        %785 = vdwg.mxu0
        %v786 = vld [vmem:[%s1] sm:$0xff]
        %v787 = vld [vmem:[%s1 + $0x8] sm:$0xff]
        %v788 = vld [vmem:[%s628] sm:$0xf]
        %v789 = vld [vmem:[%s628 + $0x4] sm:$0xf]
        %v790 = vld [vmem:[%s628 + $0x8] sm:$0xf]
        %v791 = vld [vmem:[%s628 + $0xc] sm:$0xf]
        %v792 = vld [vmem:[%s631] sm:$0x1]
        %v794 = vperm.slane %v792, 0
        %v796 = vadd.f32 %v682, %v794
        %v797 = vadd.f32 %v683, %v794
        %v798 = vpack.c.bf16 %v782, %v782
        %v799 = vpack.c.bf16 %v784, %v784
        %v801 = vunpack.c.l.b16 %v798
        %v802 = vpack.c.b16 %v801, %v801
        %803 = vrot.lane.b32.xlu0 %v802, 96
        %v804 = vpop.permute.xlu0 %803
        %vm805 = vcmask 64512
        %v807 = vsel %vm805, %v798, 0
        %v810 = vsel %vm805, %v804, 0
        %812 = vmatpush.bf16.xpose.msra.mxu0 0
        %813 = vmatpush.bf16.xpose.msra.mxu0 0
        %814 = vmatpush.bf16.xpose.msra.mxu0 0
        %815 = vmatpush.bf16.xpose.msra.mxu0 0
        %816 = vmatpush.bf16.xpose.msra.mxu0 0
        %817 = vmatpush.bf16.xpose.msra.mxu0 0
        %818 = vmatpush.bf16.xpose.msra.mxu0 0
        %819 = vmatpush.bf16.xpose.msra.mxu0 %v810
        %820 = vmatmul.bf16.gmra.mxu0 %v807
        %v821 = vpop.f32.mrf.mxu0
        %v822 = vadd.f32 %v786, %v821
        %v823 = vpop.f32.mrf.mxu0
        %824 = vdwg.mxu0
        %v826 = vunpack.c.l.b16 %v799
        %v827 = vpack.c.b16 %v826, %v826
        %828 = vrot.lane.b32.xlu0 %v827, 96
        %v829 = vpop.permute.xlu0 %828
        %v831 = vsel %vm805, %v799, 0
        %v834 = vsel %vm805, %v829, 0
        %836 = vmatpush.bf16.xpose.msra.mxu0 0
        %837 = vmatpush.bf16.xpose.msra.mxu0 0
        %838 = vmatpush.bf16.xpose.msra.mxu0 0
        %839 = vmatpush.bf16.xpose.msra.mxu0 0
        %840 = vmatpush.bf16.xpose.msra.mxu0 0
        %841 = vmatpush.bf16.xpose.msra.mxu0 0
        %842 = vmatpush.bf16.xpose.msra.mxu0 0
        %843 = vmatpush.bf16.xpose.msra.mxu0 %v834
        %844 = vmatmul.bf16.gmra.mxu0 %v831
        %v845 = vpop.f32.mrf.mxu0
        %v846 = vadd.f32 %v787, %v845
        %v847 = vpop.f32.mrf.mxu0
        %848 = vdwg.mxu0
        %v849 = vsel %vm805, %v822, -inf
        %850 = vmax.xlane.f32.xlu0 %v849
        %v851 = vpop.xlane.xlu0 %850
        %v852 = vsel %vm805, %v846, -inf
        %853 = vmax.xlane.f32.xlu0 %v852
        %v854 = vpop.xlane.xlu0 %853
        %v855 = vsub.f32 %v822, %v851
        %v856 = vsub.f32 %v846, %v854
        %v857 = vmul.f32 %v855, 1.442695
        %v858 = vpow.pop %v857
        %v859 = vmul.f32 %v856, 1.442695
        %v860 = vpow.pop %v859
        %v861 = vsel %vm805, %v858, 0.0
        %862 = vadd.xlane.f32.xlu0 %v861
        %v863 = vpop.xlane.xlu0 %862
        %v864 = vsel %vm805, %v860, 0.0
        %865 = vadd.xlane.f32.xlu0 %v864
        %v866 = vpop.xlane.xlu0 %865
        %v867 = vrcp.pop %v863
        %v868 = vrcp.pop %v866
        %v869 = vmul.f32 %v858, %v867
        %v870 = vmul.f32 %v860, %v868
        %v871 = vpack.c.bf16 %v869, %v869
        %v872 = vpack.c.bf16 %v870, %v870
        %873 = vrot.lane.b32.xlu0 %v802, 64
        %v874 = vpop.permute.xlu0 %873
        %v876 = vsel %vm805, %v871, 0
        %vm878 = vcmask 1043456
        %v880 = vsel %vm878, %v874, 0
        %882 = vmatpush.bf16.msra.mxu0 0
        %883 = vmatpush.bf16.msra.mxu0 0
        %884 = vmatpush.bf16.msra.mxu0 0
        %885 = vmatpush.bf16.msra.mxu0 0
        %886 = vmatpush.bf16.msra.mxu0 0
        %887 = vmatpush.bf16.msra.mxu0 0
        %888 = vmatpush.bf16.msra.mxu0 0
        %889 = vmatpush.bf16.msra.mxu0 %v880
        %890 = vmatmul.bf16.gmra.mxu0 %v876
        %v891 = vpop.f32.mrf.mxu0
        %v892 = vadd.f32 0.0, %v891
        %v893 = vpop.f32.mrf.mxu0
        %894 = vdwg.mxu0
        %895 = vrot.lane.b32.xlu0 %v827, 64
        %v896 = vpop.permute.xlu0 %895
        %v898 = vsel %vm805, %v872, 0
        %v901 = vsel %vm878, %v896, 0
        %903 = vmatpush.bf16.msra.mxu0 0
        %904 = vmatpush.bf16.msra.mxu0 0
        %905 = vmatpush.bf16.msra.mxu0 0
        %906 = vmatpush.bf16.msra.mxu0 0
        %907 = vmatpush.bf16.msra.mxu0 0
        %908 = vmatpush.bf16.msra.mxu0 0
        %909 = vmatpush.bf16.msra.mxu0 0
        %910 = vmatpush.bf16.msra.mxu0 %v901
        %911 = vmatmul.bf16.gmra.mxu0 %v898
        %v912 = vpop.f32.mrf.mxu0
        %v913 = vadd.f32 0.0, %v912
        %v914 = vpop.f32.mrf.mxu0
        %915 = vdwg.mxu0
        %v916 = vpack.c.bf16 %v913, %v892
        %v918 = vsel %vm805, %v916, 0
        %v921 = vsel %vm878, %v788, 0
        %923 = vmatpush.bf16.msra.mxu0 0
        %924 = vmatpush.bf16.msra.mxu0 0
        %925 = vmatpush.bf16.msra.mxu0 0
        %926 = vmatpush.bf16.msra.mxu0 0
        %927 = vmatpush.bf16.msra.mxu0 0
        %928 = vmatpush.bf16.msra.mxu0 0
        %929 = vmatpush.bf16.msra.mxu0 0
        %930 = vmatpush.bf16.msra.mxu0 %v921
        %931 = vmatmul.bf16.gmra.mxu0 %v918
        %v932 = vpop.f32.mrf.mxu0
        %v933 = vadd.f32 0.0, %v932
        %v934 = vpop.f32.mrf.mxu0
        %v935 = vadd.f32 0.0, %v934
        %936 = vdwg.mxu0
        %v937 = vadd.f32 %v796, %v933
        %v938 = vadd.f32 %v797, %v935
        %939 = vrot.lane.b32.xlu0 %v802, 120
        %v940 = vpop.permute.xlu0 %939
        %941 = vrot.lane.b32.xlu0 %v802, 88
        %v942 = vpop.permute.xlu0 %941
        %v944 = vsel %vm805, %v940, 0
        %v947 = vsel %vm805, %v942, 0
        %949 = vmatpush.bf16.xpose.msra.mxu0 0
        %950 = vmatpush.bf16.xpose.msra.mxu0 0
        %951 = vmatpush.bf16.xpose.msra.mxu0 0
        %952 = vmatpush.bf16.xpose.msra.mxu0 0
        %953 = vmatpush.bf16.xpose.msra.mxu0 0
        %954 = vmatpush.bf16.xpose.msra.mxu0 0
        %955 = vmatpush.bf16.xpose.msra.mxu0 0
        %956 = vmatpush.bf16.xpose.msra.mxu0 %v947
        %957 = vmatmul.bf16.gmra.mxu0 %v944
        %v958 = vpop.f32.mrf.mxu0
        %v959 = vadd.f32 %v786, %v958
        %v960 = vpop.f32.mrf.mxu0
        %961 = vdwg.mxu0
        %962 = vrot.lane.b32.xlu0 %v827, 120
        %v963 = vpop.permute.xlu0 %962
        %964 = vrot.lane.b32.xlu0 %v827, 88
        %v965 = vpop.permute.xlu0 %964
        %v967 = vsel %vm805, %v963, 0
        %v970 = vsel %vm805, %v965, 0
        %972 = vmatpush.bf16.xpose.msra.mxu0 0
        %973 = vmatpush.bf16.xpose.msra.mxu0 0
        %974 = vmatpush.bf16.xpose.msra.mxu0 0
        %975 = vmatpush.bf16.xpose.msra.mxu0 0
        %976 = vmatpush.bf16.xpose.msra.mxu0 0
        %977 = vmatpush.bf16.xpose.msra.mxu0 0
        %978 = vmatpush.bf16.xpose.msra.mxu0 0
        %979 = vmatpush.bf16.xpose.msra.mxu0 %v970
        %980 = vmatmul.bf16.gmra.mxu0 %v967
        %v981 = vpop.f32.mrf.mxu0
        %v982 = vadd.f32 %v787, %v981
        %v983 = vpop.f32.mrf.mxu0
        %984 = vdwg.mxu0
        %v985 = vsel %vm805, %v959, -inf
        %986 = vmax.xlane.f32.xlu0 %v985
        %v987 = vpop.xlane.xlu0 %986
        %v988 = vsel %vm805, %v982, -inf
        %989 = vmax.xlane.f32.xlu0 %v988
        %v990 = vpop.xlane.xlu0 %989
        %v991 = vsub.f32 %v959, %v987
        %v992 = vsub.f32 %v982, %v990
        %v993 = vmul.f32 %v991, 1.442695
        %v994 = vpow.pop %v993
        %v995 = vmul.f32 %v992, 1.442695
        %v996 = vpow.pop %v995
        %v997 = vsel %vm805, %v994, 0.0
        %998 = vadd.xlane.f32.xlu0 %v997
        %v999 = vpop.xlane.xlu0 %998
        %v1000 = vsel %vm805, %v996, 0.0
        %1001 = vadd.xlane.f32.xlu0 %v1000
        %v1002 = vpop.xlane.xlu0 %1001
        %v1003 = vrcp.pop %v999
        %v1004 = vrcp.pop %v1002
        %v1005 = vmul.f32 %v994, %v1003
        %v1006 = vmul.f32 %v996, %v1004
        %v1007 = vpack.c.bf16 %v1005, %v1005
        %v1008 = vpack.c.bf16 %v1006, %v1006
        %1009 = vrot.lane.b32.xlu0 %v802, 56
        %v1010 = vpop.permute.xlu0 %1009
        %v1012 = vsel %vm805, %v1007, 0
        %v1015 = vsel %vm878, %v1010, 0
        %1017 = vmatpush.bf16.msra.mxu0 0
        %1018 = vmatpush.bf16.msra.mxu0 0
        %1019 = vmatpush.bf16.msra.mxu0 0
        %1020 = vmatpush.bf16.msra.mxu0 0
        %1021 = vmatpush.bf16.msra.mxu0 0
        %1022 = vmatpush.bf16.msra.mxu0 0
        %1023 = vmatpush.bf16.msra.mxu0 0
        %1024 = vmatpush.bf16.msra.mxu0 %v1015
        %1025 = vmatmul.bf16.gmra.mxu0 %v1012
        %v1026 = vpop.f32.mrf.mxu0
        %v1027 = vadd.f32 0.0, %v1026
        %v1028 = vpop.f32.mrf.mxu0
        %1029 = vdwg.mxu0
        %1030 = vrot.lane.b32.xlu0 %v827, 56
        %v1031 = vpop.permute.xlu0 %1030
        %v1033 = vsel %vm805, %v1008, 0
        %v1036 = vsel %vm878, %v1031, 0
        %1038 = vmatpush.bf16.msra.mxu0 0
        %1039 = vmatpush.bf16.msra.mxu0 0
        %1040 = vmatpush.bf16.msra.mxu0 0
        %1041 = vmatpush.bf16.msra.mxu0 0
        %1042 = vmatpush.bf16.msra.mxu0 0
        %1043 = vmatpush.bf16.msra.mxu0 0
        %1044 = vmatpush.bf16.msra.mxu0 0
        %1045 = vmatpush.bf16.msra.mxu0 %v1036
        %1046 = vmatmul.bf16.gmra.mxu0 %v1033
        %v1047 = vpop.f32.mrf.mxu0
        %v1048 = vadd.f32 0.0, %v1047
        %v1049 = vpop.f32.mrf.mxu0
        %1050 = vdwg.mxu0
        %v1051 = vpack.c.bf16 %v1048, %v1027
        %v1053 = vsel %vm805, %v1051, 0
        %v1056 = vsel %vm878, %v789, 0
        %1058 = vmatpush.bf16.msra.mxu0 0
        %1059 = vmatpush.bf16.msra.mxu0 0
        %1060 = vmatpush.bf16.msra.mxu0 0
        %1061 = vmatpush.bf16.msra.mxu0 0
        %1062 = vmatpush.bf16.msra.mxu0 0
        %1063 = vmatpush.bf16.msra.mxu0 0
        %1064 = vmatpush.bf16.msra.mxu0 0
        %1065 = vmatpush.bf16.msra.mxu0 %v1056
        %1066 = vmatmul.bf16.gmra.mxu0 %v1053
        %v1067 = vpop.f32.mrf.mxu0
        %v1068 = vadd.f32 0.0, %v1067
        %v1069 = vpop.f32.mrf.mxu0
        %v1070 = vadd.f32 0.0, %v1069
        %1071 = vdwg.mxu0
        %v1072 = vadd.f32 %v937, %v1068
        %v1073 = vadd.f32 %v938, %v1070
        %1074 = vrot.lane.b32.xlu0 %v802, 112
        %v1075 = vpop.permute.xlu0 %1074
        %1076 = vrot.lane.b32.xlu0 %v802, 80
        %v1077 = vpop.permute.xlu0 %1076
        %v1079 = vsel %vm805, %v1075, 0
        %v1082 = vsel %vm805, %v1077, 0
        %1084 = vmatpush.bf16.xpose.msra.mxu0 0
        %1085 = vmatpush.bf16.xpose.msra.mxu0 0
        %1086 = vmatpush.bf16.xpose.msra.mxu0 0
        %1087 = vmatpush.bf16.xpose.msra.mxu0 0
        %1088 = vmatpush.bf16.xpose.msra.mxu0 0
        %1089 = vmatpush.bf16.xpose.msra.mxu0 0
        %1090 = vmatpush.bf16.xpose.msra.mxu0 0
        %1091 = vmatpush.bf16.xpose.msra.mxu0 %v1082
        %1092 = vmatmul.bf16.gmra.mxu0 %v1079
        %v1093 = vpop.f32.mrf.mxu0
        %v1094 = vadd.f32 %v786, %v1093
        %v1095 = vpop.f32.mrf.mxu0
        %1096 = vdwg.mxu0
        %1097 = vrot.lane.b32.xlu0 %v827, 112
        %v1098 = vpop.permute.xlu0 %1097
        %1099 = vrot.lane.b32.xlu0 %v827, 80
        %v1100 = vpop.permute.xlu0 %1099
        %v1102 = vsel %vm805, %v1098, 0
        %v1105 = vsel %vm805, %v1100, 0
        %1107 = vmatpush.bf16.xpose.msra.mxu0 0
        %1108 = vmatpush.bf16.xpose.msra.mxu0 0
        %1109 = vmatpush.bf16.xpose.msra.mxu0 0
        %1110 = vmatpush.bf16.xpose.msra.mxu0 0
        %1111 = vmatpush.bf16.xpose.msra.mxu0 0
        %1112 = vmatpush.bf16.xpose.msra.mxu0 0
        %1113 = vmatpush.bf16.xpose.msra.mxu0 0
        %1114 = vmatpush.bf16.xpose.msra.mxu0 %v1105
        %1115 = vmatmul.bf16.gmra.mxu0 %v1102
        %v1116 = vpop.f32.mrf.mxu0
        %v1117 = vadd.f32 %v787, %v1116
        %v1118 = vpop.f32.mrf.mxu0
        %1119 = vdwg.mxu0
        %v1120 = vsel %vm805, %v1094, -inf
        %1121 = vmax.xlane.f32.xlu0 %v1120
        %v1122 = vpop.xlane.xlu0 %1121
        %v1123 = vsel %vm805, %v1117, -inf
        %1124 = vmax.xlane.f32.xlu0 %v1123
        %v1125 = vpop.xlane.xlu0 %1124
        %v1126 = vsub.f32 %v1094, %v1122
        %v1127 = vsub.f32 %v1117, %v1125
        %v1128 = vmul.f32 %v1126, 1.442695
        %v1129 = vpow.pop %v1128
        %v1130 = vmul.f32 %v1127, 1.442695
        %v1131 = vpow.pop %v1130
        %v1132 = vsel %vm805, %v1129, 0.0
        %1133 = vadd.xlane.f32.xlu0 %v1132
        %v1134 = vpop.xlane.xlu0 %1133
        %v1135 = vsel %vm805, %v1131, 0.0
        %1136 = vadd.xlane.f32.xlu0 %v1135
        %v1137 = vpop.xlane.xlu0 %1136
        %v1138 = vrcp.pop %v1134
        %v1139 = vrcp.pop %v1137
        %v1140 = vmul.f32 %v1129, %v1138
        %v1141 = vmul.f32 %v1131, %v1139
        %v1142 = vpack.c.bf16 %v1140, %v1140
        %v1143 = vpack.c.bf16 %v1141, %v1141
        %1144 = vrot.lane.b32.xlu0 %v802, 48
        %v1145 = vpop.permute.xlu0 %1144
        %v1147 = vsel %vm805, %v1142, 0
        %v1150 = vsel %vm878, %v1145, 0
        %1152 = vmatpush.bf16.msra.mxu0 0
        %1153 = vmatpush.bf16.msra.mxu0 0
        %1154 = vmatpush.bf16.msra.mxu0 0
        %1155 = vmatpush.bf16.msra.mxu0 0
        %1156 = vmatpush.bf16.msra.mxu0 0
        %1157 = vmatpush.bf16.msra.mxu0 0
        %1158 = vmatpush.bf16.msra.mxu0 0
        %1159 = vmatpush.bf16.msra.mxu0 %v1150
        %1160 = vmatmul.bf16.gmra.mxu0 %v1147
        %v1161 = vpop.f32.mrf.mxu0
        %v1162 = vadd.f32 0.0, %v1161
        %v1163 = vpop.f32.mrf.mxu0
        %1164 = vdwg.mxu0
        %1165 = vrot.lane.b32.xlu0 %v827, 48
        %v1166 = vpop.permute.xlu0 %1165
        %v1168 = vsel %vm805, %v1143, 0
        %v1171 = vsel %vm878, %v1166, 0
        %1173 = vmatpush.bf16.msra.mxu0 0
        %1174 = vmatpush.bf16.msra.mxu0 0
        %1175 = vmatpush.bf16.msra.mxu0 0
        %1176 = vmatpush.bf16.msra.mxu0 0
        %1177 = vmatpush.bf16.msra.mxu0 0
        %1178 = vmatpush.bf16.msra.mxu0 0
        %1179 = vmatpush.bf16.msra.mxu0 0
        %1180 = vmatpush.bf16.msra.mxu0 %v1171
        %1181 = vmatmul.bf16.gmra.mxu0 %v1168
        %v1182 = vpop.f32.mrf.mxu0
        %v1183 = vadd.f32 0.0, %v1182
        %v1184 = vpop.f32.mrf.mxu0
        %1185 = vdwg.mxu0
        %v1186 = vpack.c.bf16 %v1183, %v1162
        %v1188 = vsel %vm805, %v1186, 0
        %v1191 = vsel %vm878, %v790, 0
        %1193 = vmatpush.bf16.msra.mxu0 0
        %1194 = vmatpush.bf16.msra.mxu0 0
        %1195 = vmatpush.bf16.msra.mxu0 0
        %1196 = vmatpush.bf16.msra.mxu0 0
        %1197 = vmatpush.bf16.msra.mxu0 0
        %1198 = vmatpush.bf16.msra.mxu0 0
        %1199 = vmatpush.bf16.msra.mxu0 0
        %1200 = vmatpush.bf16.msra.mxu0 %v1191
        %1201 = vmatmul.bf16.gmra.mxu0 %v1188
        %v1202 = vpop.f32.mrf.mxu0
        %v1203 = vadd.f32 0.0, %v1202
        %v1204 = vpop.f32.mrf.mxu0
        %v1205 = vadd.f32 0.0, %v1204
        %1206 = vdwg.mxu0
        %v1207 = vadd.f32 %v1072, %v1203
        %v1208 = vadd.f32 %v1073, %v1205
        %1209 = vrot.lane.b32.xlu0 %v802, 104
        %v1210 = vpop.permute.xlu0 %1209
        %1211 = vrot.lane.b32.xlu0 %v802, 72
        %v1212 = vpop.permute.xlu0 %1211
        %v1214 = vsel %vm805, %v1210, 0
        %v1217 = vsel %vm805, %v1212, 0
        %1219 = vmatpush.bf16.xpose.msra.mxu0 0
        %1220 = vmatpush.bf16.xpose.msra.mxu0 0
        %1221 = vmatpush.bf16.xpose.msra.mxu0 0
        %1222 = vmatpush.bf16.xpose.msra.mxu0 0
        %1223 = vmatpush.bf16.xpose.msra.mxu0 0
        %1224 = vmatpush.bf16.xpose.msra.mxu0 0
        %1225 = vmatpush.bf16.xpose.msra.mxu0 0
        %1226 = vmatpush.bf16.xpose.msra.mxu0 %v1217
        %1227 = vmatmul.bf16.gmra.mxu0 %v1214
        %v1228 = vpop.f32.mrf.mxu0
        %v1229 = vadd.f32 %v786, %v1228
        %v1230 = vpop.f32.mrf.mxu0
        %1231 = vdwg.mxu0
        %1232 = vrot.lane.b32.xlu0 %v827, 104
        %v1233 = vpop.permute.xlu0 %1232
        %1234 = vrot.lane.b32.xlu0 %v827, 72
        %v1235 = vpop.permute.xlu0 %1234
        %v1237 = vsel %vm805, %v1233, 0
        %v1240 = vsel %vm805, %v1235, 0
        %1242 = vmatpush.bf16.xpose.msra.mxu0 0
        %1243 = vmatpush.bf16.xpose.msra.mxu0 0
        %1244 = vmatpush.bf16.xpose.msra.mxu0 0
        %1245 = vmatpush.bf16.xpose.msra.mxu0 0
        %1246 = vmatpush.bf16.xpose.msra.mxu0 0
        %1247 = vmatpush.bf16.xpose.msra.mxu0 0
        %1248 = vmatpush.bf16.xpose.msra.mxu0 0
        %1249 = vmatpush.bf16.xpose.msra.mxu0 %v1240
        %1250 = vmatmul.bf16.gmra.mxu0 %v1237
        %v1251 = vpop.f32.mrf.mxu0
        %v1252 = vadd.f32 %v787, %v1251
        %v1253 = vpop.f32.mrf.mxu0
        %1254 = vdwg.mxu0
        %v1255 = vsel %vm805, %v1229, -inf
        %1256 = vmax.xlane.f32.xlu0 %v1255
        %v1257 = vpop.xlane.xlu0 %1256
        %v1258 = vsel %vm805, %v1252, -inf
        %1259 = vmax.xlane.f32.xlu0 %v1258
        %v1260 = vpop.xlane.xlu0 %1259
        %v1261 = vsub.f32 %v1229, %v1257
        %v1262 = vsub.f32 %v1252, %v1260
        %v1263 = vmul.f32 %v1261, 1.442695
        %v1264 = vpow.pop %v1263
        %v1265 = vmul.f32 %v1262, 1.442695
        %v1266 = vpow.pop %v1265
        %v1267 = vsel %vm805, %v1264, 0.0
        %1268 = vadd.xlane.f32.xlu0 %v1267
        %v1269 = vpop.xlane.xlu0 %1268
        %v1270 = vsel %vm805, %v1266, 0.0
        %1271 = vadd.xlane.f32.xlu0 %v1270
        %v1272 = vpop.xlane.xlu0 %1271
        %v1273 = vrcp.pop %v1269
        %v1274 = vrcp.pop %v1272
        %v1275 = vmul.f32 %v1264, %v1273
        %v1276 = vmul.f32 %v1266, %v1274
        %v1277 = vpack.c.bf16 %v1275, %v1275
        %v1278 = vpack.c.bf16 %v1276, %v1276
        %1279 = vrot.lane.b32.xlu0 %v802, 40
        %v1280 = vpop.permute.xlu0 %1279
        %v1282 = vsel %vm805, %v1277, 0
        %v1285 = vsel %vm878, %v1280, 0
        %1287 = vmatpush.bf16.msra.mxu0 0
        %1288 = vmatpush.bf16.msra.mxu0 0
        %1289 = vmatpush.bf16.msra.mxu0 0
        %1290 = vmatpush.bf16.msra.mxu0 0
        %1291 = vmatpush.bf16.msra.mxu0 0
        %1292 = vmatpush.bf16.msra.mxu0 0
        %1293 = vmatpush.bf16.msra.mxu0 0
        %1294 = vmatpush.bf16.msra.mxu0 %v1285
        %1295 = vmatmul.bf16.gmra.mxu0 %v1282
        %v1296 = vpop.f32.mrf.mxu0
        %v1297 = vadd.f32 0.0, %v1296
        %v1298 = vpop.f32.mrf.mxu0
        %1299 = vdwg.mxu0
        %1300 = vrot.lane.b32.xlu0 %v827, 40
        %v1301 = vpop.permute.xlu0 %1300
        %v1303 = vsel %vm805, %v1278, 0
        %v1306 = vsel %vm878, %v1301, 0
        %1308 = vmatpush.bf16.msra.mxu0 0
        %1309 = vmatpush.bf16.msra.mxu0 0
        %1310 = vmatpush.bf16.msra.mxu0 0
        %1311 = vmatpush.bf16.msra.mxu0 0
        %1312 = vmatpush.bf16.msra.mxu0 0
        %1313 = vmatpush.bf16.msra.mxu0 0
        %1314 = vmatpush.bf16.msra.mxu0 0
        %1315 = vmatpush.bf16.msra.mxu0 %v1306
        %1316 = vmatmul.bf16.gmra.mxu0 %v1303
        %v1317 = vpop.f32.mrf.mxu0
        %v1318 = vadd.f32 0.0, %v1317
        %v1319 = vpop.f32.mrf.mxu0
        %1320 = vdwg.mxu0
        %v1321 = vpack.c.bf16 %v1318, %v1297
        %v1323 = vsel %vm805, %v1321, 0
        %v1326 = vsel %vm878, %v791, 0
        %1328 = vmatpush.bf16.msra.mxu0 0
        %1329 = vmatpush.bf16.msra.mxu0 0
        %1330 = vmatpush.bf16.msra.mxu0 0
        %1331 = vmatpush.bf16.msra.mxu0 0
        %1332 = vmatpush.bf16.msra.mxu0 0
        %1333 = vmatpush.bf16.msra.mxu0 0
        %1334 = vmatpush.bf16.msra.mxu0 0
        %1335 = vmatpush.bf16.msra.mxu0 %v1326
        %1336 = vmatmul.bf16.gmra.mxu0 %v1323
        %v1337 = vpop.f32.mrf.mxu0
        %v1338 = vadd.f32 0.0, %v1337
        %v1339 = vpop.f32.mrf.mxu0
        %v1340 = vadd.f32 0.0, %v1339
        %1341 = vdwg.mxu0
        %v1342 = vadd.f32 %v1207, %v1338
        %v1343 = vadd.f32 %v1208, %v1340
        %v1344 = vld [vmem:[%s634] sm:$0x1]
        %v1345 = vld [vmem:[%s637] sm:$0x1]
        %v1346 = vsel %vm686, %v1342, 0.0
        %1347 = vadd.xlane.f32.xlu0 %v1346
        %v1348 = vpop.xlane.xlu0 %1347
        %v1349 = vsel %vm686, %v1343, 0.0
        %1350 = vadd.xlane.f32.xlu0 %v1349
        %v1351 = vpop.xlane.xlu0 %1350
        %v1352 = vmul.f32 %v1348, %v699
        %v1353 = vmul.f32 %v1351, %v699
        %v1354 = vsub.f32 %v1342, %v1352
        %v1355 = vsub.f32 %v1343, %v1353
        %v1356 = vmul.f32 %v1354, %v1354
        %v1357 = vmul.f32 %v1355, %v1355
        %v1358 = vsel %vm686, %v1356, 0.0
        %1359 = vadd.xlane.f32.xlu0 %v1358
        %v1360 = vpop.xlane.xlu0 %1359
        %v1361 = vsel %vm686, %v1357, 0.0
        %1362 = vadd.xlane.f32.xlu0 %v1361
        %v1363 = vpop.xlane.xlu0 %1362
        %v1364 = vmul.f32 %v1360, %v699
        %v1365 = vmul.f32 %v1363, %v699
        %v1366 = vadd.f32 %v1364, 1e-05
        %v1367 = vadd.f32 %v1365, 1e-05
        %v1368 = vrsqrt.pop %v1366
        %v1369 = vmul.f32 %v1368, %v1366
        %v1370 = vmul.f32 %v1369, %v1368
        %v1371 = vmul.f32 0.5, %v1370
        %v1372 = vsub.f32 1.5, %v1371
        %v1373 = vmul.f32 %v1368, %v1372
        %vm1374 = vweird.f32 %v1366
        %vm1375 = vweird.f32 %v1368
        %vm1376 = vmor %vm1374, %vm1375
        %v1377 = vsel %vm1376, %v1368, %v1373
        %v1378 = vrsqrt.pop %v1367
        %v1379 = vmul.f32 %v1378, %v1367
        %v1380 = vmul.f32 %v1379, %v1378
        %v1381 = vmul.f32 0.5, %v1380
        %v1382 = vsub.f32 1.5, %v1381
        %v1383 = vmul.f32 %v1378, %v1382
        %vm1384 = vweird.f32 %v1367
        %vm1385 = vweird.f32 %v1378
        %vm1386 = vmor %vm1384, %vm1385
        %v1387 = vsel %vm1386, %v1378, %v1383
        %v1388 = vmul.f32 %v1354, %v1377
        %v1389 = vmul.f32 %v1355, %v1387
        %v1391 = vperm.slane %v1344, 0
        %v1393 = vmul.f32 %v1388, %v1391
        %v1394 = vmul.f32 %v1389, %v1391
        %v1396 = vperm.slane %v1345, 0
        %v1398 = vadd.f32 %v1393, %v1396
        %v1399 = vadd.f32 %v1394, %v1396
        %v1400 = vpack.c.bf16 %v1399, %v1398
        %v1401 = vld [vmem:[%s642] sm:$0xf]
        %v1402 = vld [vmem:[%s642 + $0x4] sm:$0xf]
        %v1403 = vld [vmem:[%s642 + $0x8] sm:$0xf]
        %v1404 = vld [vmem:[%s642 + $0xc] sm:$0xf]
        %v1405 = vld [vmem:[%s645] sm:$0x1]
        %v1407 = vperm.slane %v1405, 0
        %v1413 = vunpack.c.l.b16 %v1401
        %v1414 = vunpack.c.l.b16 %v1402
        %v1415 = vunpack.c.l.b16 %v1403
        %v1416 = vunpack.c.l.b16 %v1404
        %v1417 = vpack.c.b16 %v1414, %v1413
        %v1418 = vpack.c.b16 %v1416, %v1415
        %v1422 = vsel %vm686, %v1400, 0
        %1424 = vmatpush.bf16.msra.mxu0 0
        %1425 = vmatpush.bf16.msra.mxu0 0
        %1426 = vmatpush.bf16.msra.mxu0 0
        %1427 = vmatpush.bf16.msra.mxu0 0
        %1428 = vmatpush.bf16.msra.mxu0 0
        %1429 = vmatpush.bf16.msra.mxu0 0
        %1430 = vmatpush.bf16.msra.mxu0 %v1418
        %1431 = vmatpush.bf16.msra.mxu0 %v1417
        %1432 = vmatmul.bf16.gmra.mxu0 %v1422
        %v1433 = vpop.f32.mrf.mxu0
        %v1434 = vadd.f32 %v1407, %v1433
        %v1435 = vpop.f32.mrf.mxu0
        %v1436 = vadd.f32 %v1407, %v1435
        %1437 = vdwg.mxu0
        %v1438 = vmul.f32 %v1434, 1.702
        %v1439 = vmul.f32 %v1436, 1.702
        %v1440 = vxor.u32 %v1438, 2147483648
        %v1441 = vxor.u32 %v1439, 2147483648
        %v1442 = vmul.f32 %v1440, 1.442695
        %v1443 = vpow.pop %v1442
        %v1444 = vmul.f32 %v1441, 1.442695
        %v1445 = vpow.pop %v1444
        %v1446 = vadd.f32 %v1443, 1.0
        %v1447 = vadd.f32 %v1445, 1.0
        %v1448 = vrcp.pop %v1446
        %v1449 = vmul.f32 %v1446, %v1448
        %v1450 = vsub.f32 1.0, %v1449
        %v1451 = vmul.f32 %v1448, %v1450
        %v1452 = vadd.f32 %v1448, %v1451
        %vm1453 = vweird.f32 %v1446
        %vm1454 = vweird.f32 %v1448
        %vm1455 = vmor %vm1453, %vm1454
        %v1456 = vsel %vm1455, %v1448, %v1452
        %v1457 = vand.u32 2147483647, %v1446
        %vm1458 = vcmp.eq.f32.partialorder %v1457, 8.507059e+37
        %v1459 = vand.u32 %v1446, 2147483648
        %v1460 = vor.u32 1.1754944e-38, %v1459
        %v1461 = vsel %vm1458, %v1460, %v1456
        %v1462 = vmul.f32 1.0, %v1461
        %v1463 = vrcp.pop %v1447
        %v1464 = vmul.f32 %v1447, %v1463
        %v1465 = vsub.f32 1.0, %v1464
        %v1466 = vmul.f32 %v1463, %v1465
        %v1467 = vadd.f32 %v1463, %v1466
        %vm1468 = vweird.f32 %v1447
        %vm1469 = vweird.f32 %v1463
        %vm1470 = vmor %vm1468, %vm1469
        %v1471 = vsel %vm1470, %v1463, %v1467
        %v1472 = vand.u32 2147483647, %v1447
        %vm1473 = vcmp.eq.f32.partialorder %v1472, 8.507059e+37
        %v1474 = vand.u32 %v1447, 2147483648
        %v1475 = vor.u32 1.1754944e-38, %v1474
        %v1476 = vsel %vm1473, %v1475, %v1471
        %v1477 = vmul.f32 1.0, %v1476
        %v1478 = vmul.f32 %v1434, %v1462
        %v1479 = vmul.f32 %v1436, %v1477
        %v1480 = vpack.c.bf16 %v1479, %v1478
        %v1481 = vld [vmem:[%s650] sm:$0xf]
        %v1482 = vld [vmem:[%s650 + $0x4] sm:$0xf]
        %v1483 = vld [vmem:[%s650 + $0x8] sm:$0xf]
        %v1484 = vld [vmem:[%s650 + $0xc] sm:$0xf]
        %v1485 = vld [vmem:[%s650 + $0x10] sm:$0xf]
        %v1486 = vld [vmem:[%s650 + $0x14] sm:$0xf]
        %v1487 = vld [vmem:[%s650 + $0x18] sm:$0xf]
        %v1488 = vld [vmem:[%s650 + $0x1c] sm:$0xf]
        %v1489 = vld [vmem:[%s650 + $0x20] sm:$0xf]
        %v1490 = vld [vmem:[%s650 + $0x24] sm:$0xf]
        %v1491 = vld [vmem:[%s650 + $0x28] sm:$0xf]
        %v1492 = vld [vmem:[%s650 + $0x2c] sm:$0xf]
        %v1493 = vld [vmem:[%s650 + $0x30] sm:$0xf]
        %v1494 = vld [vmem:[%s650 + $0x34] sm:$0xf]
        %v1495 = vld [vmem:[%s650 + $0x38] sm:$0xf]
        %v1496 = vld [vmem:[%s650 + $0x3c] sm:$0xf]
        %v1513 = vunpack.c.l.b16 %v1481
        %v1514 = vunpack.c.l.b16 %v1482
        %v1515 = vunpack.c.l.b16 %v1483
        %v1516 = vunpack.c.l.b16 %v1484
        %v1517 = vunpack.c.l.b16 %v1485
        %v1518 = vunpack.c.l.b16 %v1486
        %v1519 = vunpack.c.l.b16 %v1487
        %v1520 = vunpack.c.l.b16 %v1488
        %v1521 = vunpack.c.l.b16 %v1489
        %v1522 = vunpack.c.l.b16 %v1490
        %v1523 = vunpack.c.l.b16 %v1491
        %v1524 = vunpack.c.l.b16 %v1492
        %v1525 = vunpack.c.l.b16 %v1493
        %v1526 = vunpack.c.l.b16 %v1494
        %v1527 = vunpack.c.l.b16 %v1495
        %v1528 = vunpack.c.l.b16 %v1496
        %v1529 = vpack.c.b16 %v1514, %v1513
        %v1530 = vpack.c.b16 %v1516, %v1515
        %v1531 = vpack.c.b16 %v1518, %v1517
        %v1532 = vpack.c.b16 %v1520, %v1519
        %v1533 = vpack.c.b16 %v1522, %v1521
        %v1534 = vpack.c.b16 %v1524, %v1523
        %v1535 = vpack.c.b16 %v1526, %v1525
        %v1536 = vpack.c.b16 %v1528, %v1527
        %1545 = vmatpush.bf16.msra.mxu0 %v1536
        %1546 = vmatpush.bf16.msra.mxu0 %v1535
        %1547 = vmatpush.bf16.msra.mxu0 %v1534
        %1548 = vmatpush.bf16.msra.mxu0 %v1533
        %1549 = vmatpush.bf16.msra.mxu0 %v1532
        %1550 = vmatpush.bf16.msra.mxu0 %v1531
        %1551 = vmatpush.bf16.msra.mxu0 %v1530
        %1552 = vmatpush.bf16.msra.mxu0 %v1529
        %1553 = vmatmul.bf16.gmra.mxu0 %v1480
        %v1554 = vpop.f32.mrf.mxu0
        %v1555 = vadd.f32 0.0, %v1554
        %v1556 = vpop.f32.mrf.mxu0
        %v1557 = vadd.f32 0.0, %v1556
        %1558 = vdwg.mxu0
        %v1559 = vadd.f32 %v1342, %v1555
        %v1560 = vadd.f32 %v1343, %v1557
        %v1561 = vld [vmem:[%s653] sm:$0x1]
        %v1563 = vperm.slane %v1561, 0
        %v1565 = vadd.f32 %v1559, %v1563
        %v1566 = vadd.f32 %v1560, %v1563
        %p1567 = scmp.ne.s32.totalorder %s28, 1
        // Predicated region
        $region105: #{clip_text_forward.1} parent=79 // pred_check
          %p1568 = pneg %p1567
        $region106: #{clip_text_forward.1} parent=79 // pred_check_branch
          %1570 = sbr.rel (%p1568) target = $region108
        $region107: #{clip_text_forward.1} parent=79 // pred_region
          %1571 = vst.msk [vmem:[#allocation2] sm:$0xff] %vm686, %v1565
          %1572 = vst.msk [vmem:[#allocation2 + $0x8] sm:$0xff] %vm686, %v1566
        $region108: #{clip_text_forward.1} parent=79 // pred_fallthru
          _
        %p1573 = scmp.eq.s32.totalorder %s28, 1
        // Predicated region
        $region109: #{clip_text_forward.1} parent=79 // pred_check
          %p1574 = pneg %p1573
        $region110: #{clip_text_forward.1} parent=79 // pred_check_branch
          %1576 = sbr.rel (%p1574) target = $region112
        $region111: #{clip_text_forward.1} parent=79 // pred_region
          %v1577 = vld [vmem:[%s14] sm:$0x1]
          %v1578 = vld [vmem:[%s15] sm:$0x1]
          %v1579 = vsel %vm686, %v1565, 0.0
          %1580 = vadd.xlane.f32.xlu0 %v1579
          %v1581 = vpop.xlane.xlu0 %1580
          %v1582 = vsel %vm686, %v1566, 0.0
          %1583 = vadd.xlane.f32.xlu0 %v1582
          %v1584 = vpop.xlane.xlu0 %1583
          %v1585 = vmul.f32 %v1581, %v699
          %v1586 = vmul.f32 %v1584, %v699
          %v1587 = vsub.f32 %v1565, %v1585
          %v1588 = vsub.f32 %v1566, %v1586
          %v1589 = vmul.f32 %v1587, %v1587
          %v1590 = vmul.f32 %v1588, %v1588
          %v1591 = vsel %vm686, %v1589, 0.0
          %1592 = vadd.xlane.f32.xlu0 %v1591
          %v1593 = vpop.xlane.xlu0 %1592
          %v1594 = vsel %vm686, %v1590, 0.0
          %1595 = vadd.xlane.f32.xlu0 %v1594
          %v1596 = vpop.xlane.xlu0 %1595
          %v1597 = vmul.f32 %v1593, %v699
          %v1598 = vmul.f32 %v1596, %v699
          %v1599 = vadd.f32 %v1597, 1e-05
          %v1600 = vadd.f32 %v1598, 1e-05
          %v1601 = vrsqrt.pop %v1599
          %v1602 = vmul.f32 %v1601, %v1599
          %v1603 = vmul.f32 %v1602, %v1601
          %v1604 = vmul.f32 0.5, %v1603
          %v1605 = vsub.f32 1.5, %v1604
          %v1606 = vmul.f32 %v1601, %v1605
          %vm1607 = vweird.f32 %v1599
          %vm1608 = vweird.f32 %v1601
          %vm1609 = vmor %vm1607, %vm1608
          %v1610 = vsel %vm1609, %v1601, %v1606
          %v1611 = vrsqrt.pop %v1600
          %v1612 = vmul.f32 %v1611, %v1600
          %v1613 = vmul.f32 %v1612, %v1611
          %v1614 = vmul.f32 0.5, %v1613
          %v1615 = vsub.f32 1.5, %v1614
          %v1616 = vmul.f32 %v1611, %v1615
          %vm1617 = vweird.f32 %v1600
          %vm1618 = vweird.f32 %v1611
          %vm1619 = vmor %vm1617, %vm1618
          %v1620 = vsel %vm1619, %v1611, %v1616
          %v1621 = vmul.f32 %v1587, %v1610
          %v1622 = vmul.f32 %v1588, %v1620
          %v1624 = vperm.slane %v1577, 0
          %v1626 = vmul.f32 %v1621, %v1624
          %v1627 = vmul.f32 %v1622, %v1624
          %v1629 = vperm.slane %v1578, 0
          %v1631 = vadd.f32 %v1626, %v1629
          %v1632 = vadd.f32 %v1627, %v1629
          %1633 = vst.msk [vmem:[#allocation2] sm:$0xff] %vm686, %v1631
          %1634 = vst.msk [vmem:[#allocation2 + $0x8] sm:$0xff] %vm686, %v1632
        $region112: #{clip_text_forward.1} parent=79 // pred_fallthru
          _
        // Predicated region
        $region113: #{clip_text_forward.1} parent=79 // pred_check
          %p1635 = pneg %p416
        $region114: #{clip_text_forward.1} parent=79 // pred_check_branch
          %1637 = sbr.rel (%p1635) target = $region116
        $region115: #{clip_text_forward.1} parent=79 // pred_region
          %1639 = vsyncadd [#allocation3], 0
          %s1640 = sshll.u32 [#allocation2], 4
          %s1641 = int_to_ptr.vmem [resolvable:$true] %s1640
          %s1642 = sshll.u32 %s16, 4
          %s1643 = int_to_ptr.hbm [resolvable:$true] %s1642
          %1648 = dma.vmem_to_hbm [thread:$0]  %s1641, 256, %s1643, [#allocation3], 128, 128, 8
        $region116: #{clip_text_forward.1} parent=79 // pred_fallthru
          _
        // Predicated region
        $region117: #{clip_text_forward.1} parent=79 // pred_check
          %p1649 = pneg %p416
        $region118: #{clip_text_forward.1} parent=79 // pred_check_branch
          %1651 = sbr.rel (%p1649) target = $region120
        $region119: #{clip_text_forward.1} parent=79 // pred_region
          %1653 = dma.done [#allocation3], 256
        $region120: #{clip_text_forward.1} parent=79 // pred_fallthru
          _
      $region80: #{clip_text_forward.1} parent=5 // pred_fallthru
        _
      %p1654 = scmp.le.s32.totalorder 2, %s23
      // Predicated region
      $region121: #{clip_text_forward.1} parent=5 // pred_check
        %p1655 = pneg %p1654
      $region122: #{clip_text_forward.1} parent=5 // pred_check_branch
        %1657 = sbr.rel (%p1655) target = $region124
      $region123: #{clip_text_forward.1} parent=5 // pred_region
        %s1658 = ssub.s32 %s23, 2
      $region124: #{clip_text_forward.1} parent=5 // pred_fallthru
        _
    $region6: #{clip_text_forward.1} parent=1 // loop_footer
      %s27 = sadd.s32 1, %s23
    $region7: #{clip_text_forward.1} parent=1 // loop_footer_branch
      %22 = sbr.rel target = $region3
    $region8: #{clip_text_forward.1} parent=1 // loop_exit
      _
    %1659 = vsyncpa [#allocation3], 1
    %s1660 = scalar_lea.sflag [#allocation3], 1
    %1661 = vsyncpa %s1660, 1

</llo_original>
